<compile_context>
chip_gen: v7x
topology: tpu7x:2x2x1
jax: 0.10.0
libtpu: 0.0.40
codegen_flags: <defaults>
</compile_context>

<pallas_src>
import functools

import jax
import jax.numpy as jnp
from jax import lax
from jax.experimental import pallas as pl
from jax.experimental.pallas import tpu as pltpu


def _pick_spatial_tile(s_dim, row_blk, no, itemsize, n_row_blocks,
                       max_bytes=4 << 20):
    """Spatial (lane) tile: multiple of 128 dividing s_dim, sized by a per-block
    byte budget; full extent for maps whose flattened size is not 128-aligned."""
    if s_dim % 128 != 0:
        return s_dim
    cap = max(128, ((max_bytes // (row_blk * no * itemsize)) // 128) * 128)
    t = min(cap, s_dim)
    t -= t % 128
    while s_dim % t != 0:
        t -= 128
    # v7x has 2 TensorCores: keep >= 2 parallel grid blocks when we can.
    if n_row_blocks * (s_dim // t) < 2:
        half = (t // 2) - ((t // 2) % 128)
        if half >= 128 and s_dim % half == 0:
            t = half
    return t


def _decode_into(stride, nx, st, anchors_wh, x_ref, o_ref):
    """Full-tile sigmoid + YOLO decode of one (na, no, st) tile into o_ref
    (same shape).  Anchors & stride are baked in as Python-float constants."""
    no = x_ref.shape[1]
    odt = o_ref.dtype
    s = jax.nn.sigmoid(x_ref[...].astype(jnp.float32))   # one full-tile sigmoid

    # Flattened spatial coords of this tile, generated in-register (no DMA):
    #   gy = floor((idx + 0.5) / nx), gx = idx - gy*nx   (exact for idx < 2^21)
    base = (pl.program_id(1) * st).astype(jnp.float32)
    idx = base + lax.broadcasted_iota(jnp.int32, (1, 1, st), 2).astype(jnp.float32)
    gy = jnp.floor((idx + 0.5) * (1.0 / nx))
    gx = idx - gy * float(nx)

    sf = float(stride)
    # Lane-dense sliced stores (channel axis is the sublane axis).
    o_ref[:, 0:1, :] = ((s[:, 0:1, :] * 2.0 - 0.5 + gx) * sf).astype(odt)
    o_ref[:, 1:2, :] = ((s[:, 1:2, :] * 2.0 - 0.5 + gy) * sf).astype(odt)
    # Per-row anchor (w, h): rows of the block are anchors 0..na-1, so the
    # anchor is a plain Python float per statically-unrolled row.
    for j, (aw, ah) in enumerate(anchors_wh):
        o_ref[j:j + 1, 2:3, :] = (jnp.square(s[j:j + 1, 2:3, :] * 2.0) * aw).astype(odt)
        o_ref[j:j + 1, 3:4, :] = (jnp.square(s[j:j + 1, 3:4, :] * 2.0) * ah).astype(odt)
    o_ref[:, 4:, :] = s[:, 4:, :].astype(odt)


def _detect_kernel_fused(stride, nx, st, anchors_wh, x_ref, y_ref, xs_ref, dec_ref):
    # x_ref  : (na, no, st)  lane-dense input tile
    # y_ref  : (na, st, no)  decoded output, channel-last (fused permute)
    # xs_ref : (na, st, no)  permuted raw logits (PyTorch's returned x[i])
    # dec_ref: (na, no, st)  f32 VMEM scratch holding the decoded tile
    _decode_into(stride, nx, st, anchors_wh, x_ref, dec_ref)
    odt = y_ref.dtype
    for r in range(x_ref.shape[0]):
        # In-kernel channel-last permute: 2-D (no, st) -> (st, no) transposes.
        # XLU slots are idle in this kernel, so this is essentially free and
        # removes a full read+write HBM pass that XLA would otherwise do.
        y_ref[r, :, :] = jnp.transpose(dec_ref[r, :, :], (1, 0)).astype(odt)
        xs_ref[r, :, :] = jnp.transpose(x_ref[r, :, :], (1, 0))


def _detect_kernel_basic(stride, nx, st, anchors_wh, x_ref, y_ref):
    # Channel-major output (na, no, st); permute done by XLA in the wrapper.
    _decode_into(stride, nx, st, anchors_wh, x_ref, y_ref)


def _detect_layer_pallas(xi_flat, nx, stride, anchors_wh):
    r_dim, no, s_dim = xi_flat.shape          # r_dim = bs * na
    na = len(anchors_wh)
    bs = r_dim // na
    itemsize = jnp.dtype(xi_flat.dtype).itemsize
    st = _pick_spatial_tile(s_dim, na, no, itemsize, bs)
    grid = (bs, s_dim // st)
    cp = pltpu.CompilerParams(
        dimension_semantics=("parallel", "parallel"),
        vmem_limit_bytes=48 * 1024 * 1024,
    )
    # Fused channel-last path requires tile-aligned shapes for the in-kernel
    # transpose: spatial multiple of 128 lanes, channels multiple of 8
    # sublanes, 32-bit data.
    fused = (s_dim % 128 == 0) and (no % 8 == 0) and (itemsize == 4)

    if fused:
        kernel = functools.partial(_detect_kernel_fused, float(stride), int(nx),
                                   int(st), anchors_wh)
        y, xp = pl.pallas_call(
            kernel,
            out_shape=(
                jax.ShapeDtypeStruct((r_dim, s_dim, no), xi_flat.dtype),  # decoded y
                jax.ShapeDtypeStruct((r_dim, s_dim, no), xi_flat.dtype),  # permuted x
            ),
            grid=grid,
            in_specs=[pl.BlockSpec((na, no, st), lambda b, t: (b, 0, t))],
            out_specs=(
                pl.BlockSpec((na, st, no), lambda b, t: (b, t, 0)),
                pl.BlockSpec((na, st, no), lambda b, t: (b, t, 0)),
            ),
            scratch_shapes=[pltpu.VMEM((na, no, st), jnp.float32)],
            compiler_params=cp,
        )(xi_flat)
        return y, xp, True

    kernel = functools.partial(_detect_kernel_basic, float(stride), int(nx),
                               int(st), anchors_wh)
    y = pl.pallas_call(
        kernel,
        out_shape=jax.ShapeDtypeStruct((r_dim, no, s_dim), xi_flat.dtype),
        grid=grid,
        in_specs=[pl.BlockSpec((na, no, st), lambda b, t: (b, 0, t))],
        out_specs=pl.BlockSpec((na, no, st), lambda b, t: (b, 0, t)),
        compiler_params=cp,
    )(xi_flat)
    return y, None, False


class DetectPallas:
    """JAX/Pallas equivalent of the PyTorch Detect head (eval mode)."""

    def __init__(self, nc, anchors, stride):
        self.nc = nc
        self.no = nc + 5
        self.nl = len(anchors)
        self.na = len(anchors[0]) // 2
        # Anchors baked into the kernel as Python-float constants.  Units match
        # the PyTorch module's anchor_grid buffer (= anchors exactly as passed).
        self.anchors_wh = tuple(
            tuple((float(row[2 * j]), float(row[2 * j + 1]))
                  for j in range(self.na))
            for row in anchors)
        self.stride = tuple(float(s) for s in stride)

    def __call__(self, x_list):
        z, xs_out = [], []
        for i in range(self.nl):
            bs, _, ny, nx = x_list[i].shape
            s_dim = ny * nx
            # free reshape: (bs, na*no, ny, nx) -> (bs*na, no, ny*nx)
            xi = x_list[i].reshape(bs * self.na, self.no, s_dim)
            y, xp, fused = _detect_layer_pallas(xi, nx, self.stride[i],
                                                self.anchors_wh[i])
            if fused:
                # Outputs are already channel-last; only free reshapes remain.
                z.append(y.reshape(bs, self.na * s_dim, self.no))
                xs_out.append(xp.reshape(bs, self.na, ny, nx, self.no))
            else:
                # TODO(synk): extend the fused channel-last path to spatial
                # extents that aren't 128-aligned (needs in-kernel lane padding
                # before the transpose); small/odd maps use an XLA permute.
                y_perm = jnp.transpose(y.reshape(bs, self.na, self.no, ny, nx),
                                       (0, 1, 3, 4, 2))
                z.append(y_perm.reshape(bs, self.na * s_dim, self.no))
                xs_out.append(jnp.transpose(
                    x_list[i].reshape(bs, self.na, self.no, ny, nx),
                    (0, 1, 3, 4, 2)))
        # TODO(synk): fuse this concat by writing each layer directly into a
        # preallocated (bs, sum(na*S), no) buffer via input_output_aliases.
        return jnp.concatenate(z, axis=1), xs_out


def detect_reference(x_list, nc, anchors, stride):
    """Pure-JAX reference reproducing the PyTorch forward (eval mode)."""
    no = nc + 5
    nl = len(anchors)
    na = len(anchors[0]) // 2
    a = jnp.asarray(anchors, jnp.float32).reshape(nl, -1, 2)
    z, xs = [], []
    for i in range(nl):
        bs, _, ny, nx = x_list[i].shape
        xi = jnp.transpose(
            x_list[i].reshape(bs, na, no, ny, nx), (0, 1, 3, 4, 2))
        yv, xv = jnp.meshgrid(jnp.arange(ny), jnp.arange(nx), indexing="ij")
        grid = jnp.stack((xv, yv), axis=2).reshape(1, 1, ny, nx, 2).astype(jnp.float32)
        y = jax.nn.sigmoid(xi)
        xy = (y[..., 0:2] * 2.0 - 0.5 + grid) * stride[i]
        wh = (y[..., 2:4] * 2.0) ** 2 * a[i].reshape(1, na, 1, 1, 2)
        y = jnp.concatenate([xy, wh, y[..., 4:]], axis=-1)
        z.append(y.reshape(bs, -1, no))
        xs.append(xi)
    return jnp.concatenate(z, axis=1), xs


if __name__ == "__main__":
    # 2 detection layers, 3 anchors each, nc=3 (no=8).
    #   layer 0: 16x16 map (spatial 256, 128-aligned -> fused channel-last path)
    #   layer 1:  8x8  map (spatial  64, unaligned   -> fallback path)
    nc = 3
    anchors = ((10, 13, 16, 30, 33, 23), (30, 61, 62, 45, 59, 119))
    stride = (8.0, 16.0)
    na, no = 3, nc + 5

    key = jax.random.PRNGKey(0)
    k0, k1 = jax.random.split(key)
    x0 = jax.random.normal(k0, (2, na * no, 16, 16), jnp.float32)
    x1 = jax.random.normal(k1, (2, na * no, 8, 8), jnp.float32)

    det = DetectPallas(nc, anchors, stride)
    z, xs = det([x0, x1])
    jax.block_until_ready(z)
    jax.block_until_ready(xs)

    # Numerical check against a pure-JAX reference of the PyTorch semantics.
    z_ref, xs_ref = detect_reference([x0, x1], nc, anchors, stride)
    assert z.shape == z_ref.shape == (2, na * (16 * 16 + 8 * 8), no)
    assert jnp.allclose(z, z_ref, atol=1e-5, rtol=1e-5)
    for a_out, a_ref in zip(xs, xs_ref):
        assert a_out.shape == a_ref.shape
        assert jnp.allclose(a_out, a_ref, atol=1e-6, rtol=1e-6)

    print("KERNEL_OK")
</pallas_src>

<mosaic_0001>
module attributes {stable_mosaic.version = 11 : i64} {
  func.func @_detect_kernel_fused(%arg0: i32, %arg1: i32, %arg2: memref<3x8x256xf32, #tpu.memory_space<vmem>>, %arg3: memref<3x256x8xf32, #tpu.memory_space<vmem>>, %arg4: memref<3x256x8xf32, #tpu.memory_space<vmem>>, %arg5: memref<3x8x256xf32, #tpu.memory_space<vmem>>) attributes {dimension_semantics = [#tpu.dimension_semantics<parallel>, #tpu.dimension_semantics<parallel>], iteration_bounds = array<i64: 2, 1>, scalar_prefetch = 0 : i64, scratch_operands = 1 : i64, tpu.core_type = #tpu.core_type<tc>, window_params = [{transform_indices = @transform_0, window_bounds = array<i64: 3, 8, 256>}, {transform_indices = @transform_1, window_bounds = array<i64: 3, 256, 8>}, {transform_indices = @transform_2, window_bounds = array<i64: 3, 256, 8>}]} {
    %c0 = arith.constant 0 : index
    %c0_0 = arith.constant 0 : index
    %c0_1 = arith.constant 0 : index
    %0 = vector.load %arg2[%c0, %c0_0, %c0_1] : memref<3x8x256xf32, #tpu.memory_space<vmem>>, vector<3x8x256xf32>
    %1 = arith.negf %0 : vector<3x8x256xf32>
    %2 = math.exp %1 : vector<3x8x256xf32>
    %cst = arith.constant 1.000000e+00 : f32
    %3 = vector.broadcast %cst : f32 to vector<3x8x256xf32>
    %4 = arith.addf %3, %2 : vector<3x8x256xf32>
    %5 = arith.divf %3, %4 : vector<3x8x256xf32>
    %c256_i32 = arith.constant 256 : i32
    %6 = arith.muli %arg1, %c256_i32 : i32
    %7 = arith.sitofp %6 : i32 to f32
    %8 = tpu.iota {dimensions = array<i32: 2>} : vector<1x1x256xi32>
    %9 = arith.sitofp %8 : vector<1x1x256xi32> to vector<1x1x256xf32>
    %10 = vector.broadcast %7 : f32 to vector<1x1x256xf32>
    %11 = arith.addf %10, %9 : vector<1x1x256xf32>
    %cst_2 = arith.constant 5.000000e-01 : f32
    %12 = vector.broadcast %cst_2 : f32 to vector<1x1x256xf32>
    %13 = arith.addf %11, %12 : vector<1x1x256xf32>
    %cst_3 = arith.constant 6.250000e-02 : f32
    %14 = vector.broadcast %cst_3 : f32 to vector<1x1x256xf32>
    %15 = arith.mulf %13, %14 : vector<1x1x256xf32>
    %16 = math.floor %15 : vector<1x1x256xf32>
    %cst_4 = arith.constant 1.600000e+01 : f32
    %17 = vector.broadcast %cst_4 : f32 to vector<1x1x256xf32>
    %18 = arith.mulf %16, %17 : vector<1x1x256xf32>
    %19 = arith.subf %11, %18 : vector<1x1x256xf32>
    %20 = vector.extract_strided_slice %5 {offsets = [0, 0, 0], sizes = [3, 1, 256], strides = [1, 1, 1]} : vector<3x8x256xf32> to vector<3x1x256xf32>
    %cst_5 = arith.constant 2.000000e+00 : f32
    %21 = vector.broadcast %cst_5 : f32 to vector<3x1x256xf32>
    %22 = arith.mulf %20, %21 : vector<3x1x256xf32>
    %cst_6 = arith.constant 5.000000e-01 : f32
    %23 = vector.broadcast %cst_6 : f32 to vector<3x1x256xf32>
    %24 = arith.subf %22, %23 : vector<3x1x256xf32>
    %25 = vector.broadcast %19 : vector<1x1x256xf32> to vector<3x1x256xf32>
    %26 = arith.addf %24, %25 : vector<3x1x256xf32>
    %cst_7 = arith.constant 8.000000e+00 : f32
    %27 = vector.broadcast %cst_7 : f32 to vector<3x1x256xf32>
    %28 = arith.mulf %26, %27 : vector<3x1x256xf32>
    %c0_8 = arith.constant 0 : index
    %c0_9 = arith.constant 0 : index
    %c0_10 = arith.constant 0 : index
    %29 = vector.load %arg5[%c0_8, %c0_9, %c0_10] : memref<3x8x256xf32, #tpu.memory_space<vmem>>, vector<3x1x256xf32>
    tpu.vector_store %arg5[%c0_8, %c0_9, %c0_10], %28 {strides = array<i32>} : memref<3x8x256xf32, #tpu.memory_space<vmem>>, vector<3x1x256xf32>,
    %30 = vector.extract_strided_slice %5 {offsets = [0, 1, 0], sizes = [3, 1, 256], strides = [1, 1, 1]} : vector<3x8x256xf32> to vector<3x1x256xf32>
    %cst_11 = arith.constant 2.000000e+00 : f32
    %31 = vector.broadcast %cst_11 : f32 to vector<3x1x256xf32>
    %32 = arith.mulf %30, %31 : vector<3x1x256xf32>
    %cst_12 = arith.constant 5.000000e-01 : f32
    %33 = vector.broadcast %cst_12 : f32 to vector<3x1x256xf32>
    %34 = arith.subf %32, %33 : vector<3x1x256xf32>
    %35 = vector.broadcast %16 : vector<1x1x256xf32> to vector<3x1x256xf32>
    %36 = arith.addf %34, %35 : vector<3x1x256xf32>
    %cst_13 = arith.constant 8.000000e+00 : f32
    %37 = vector.broadcast %cst_13 : f32 to vector<3x1x256xf32>
    %38 = arith.mulf %36, %37 : vector<3x1x256xf32>
    %c0_14 = arith.constant 0 : index
    %c1 = arith.constant 1 : index
    %c0_15 = arith.constant 0 : index
    %39 = vector.load %arg5[%c0_14, %c1, %c0_15] : memref<3x8x256xf32, #tpu.memory_space<vmem>>, vector<3x1x256xf32>
    tpu.vector_store %arg5[%c0_14, %c1, %c0_15], %38 {strides = array<i32>} : memref<3x8x256xf32, #tpu.memory_space<vmem>>, vector<3x1x256xf32>,
    %40 = vector.extract_strided_slice %5 {offsets = [0, 2, 0], sizes = [1, 1, 256], strides = [1, 1, 1]} : vector<3x8x256xf32> to vector<1x1x256xf32>
    %cst_16 = arith.constant 2.000000e+00 : f32
    %41 = vector.broadcast %cst_16 : f32 to vector<1x1x256xf32>
    %42 = arith.mulf %40, %41 : vector<1x1x256xf32>
    %43 = arith.mulf %42, %42 : vector<1x1x256xf32>
    %cst_17 = arith.constant 1.000000e+01 : f32
    %44 = vector.broadcast %cst_17 : f32 to vector<1x1x256xf32>
    %45 = arith.mulf %43, %44 : vector<1x1x256xf32>
    %c0_18 = arith.constant 0 : index
    %c2 = arith.constant 2 : index
    %c0_19 = arith.constant 0 : index
    %46 = vector.load %arg5[%c0_18, %c2, %c0_19] : memref<3x8x256xf32, #tpu.memory_space<vmem>>, vector<1x1x256xf32>
    tpu.vector_store %arg5[%c0_18, %c2, %c0_19], %45 {strides = array<i32>} : memref<3x8x256xf32, #tpu.memory_space<vmem>>, vector<1x1x256xf32>,
    %47 = vector.extract_strided_slice %5 {offsets = [0, 3, 0], sizes = [1, 1, 256], strides = [1, 1, 1]} : vector<3x8x256xf32> to vector<1x1x256xf32>
    %cst_20 = arith.constant 2.000000e+00 : f32
    %48 = vector.broadcast %cst_20 : f32 to vector<1x1x256xf32>
    %49 = arith.mulf %47, %48 : vector<1x1x256xf32>
    %50 = arith.mulf %49, %49 : vector<1x1x256xf32>
    %cst_21 = arith.constant 1.300000e+01 : f32
    %51 = vector.broadcast %cst_21 : f32 to vector<1x1x256xf32>
    %52 = arith.mulf %50, %51 : vector<1x1x256xf32>
    %c0_22 = arith.constant 0 : index
    %c3 = arith.constant 3 : index
    %c0_23 = arith.constant 0 : index
    %53 = vector.load %arg5[%c0_22, %c3, %c0_23] : memref<3x8x256xf32, #tpu.memory_space<vmem>>, vector<1x1x256xf32>
    tpu.vector_store %arg5[%c0_22, %c3, %c0_23], %52 {strides = array<i32>} : memref<3x8x256xf32, #tpu.memory_space<vmem>>, vector<1x1x256xf32>,
    %54 = vector.extract_strided_slice %5 {offsets = [1, 2, 0], sizes = [1, 1, 256], strides = [1, 1, 1]} : vector<3x8x256xf32> to vector<1x1x256xf32>
    %cst_24 = arith.constant 2.000000e+00 : f32
    %55 = vector.broadcast %cst_24 : f32 to vector<1x1x256xf32>
    %56 = arith.mulf %54, %55 : vector<1x1x256xf32>
    %57 = arith.mulf %56, %56 : vector<1x1x256xf32>
    %cst_25 = arith.constant 1.600000e+01 : f32
    %58 = vector.broadcast %cst_25 : f32 to vector<1x1x256xf32>
    %59 = arith.mulf %57, %58 : vector<1x1x256xf32>
    %c1_26 = arith.constant 1 : index
    %c2_27 = arith.constant 2 : index
    %c0_28 = arith.constant 0 : index
    %60 = vector.load %arg5[%c1_26, %c2_27, %c0_28] : memref<3x8x256xf32, #tpu.memory_space<vmem>>, vector<1x1x256xf32>
    tpu.vector_store %arg5[%c1_26, %c2_27, %c0_28], %59 {strides = array<i32>} : memref<3x8x256xf32, #tpu.memory_space<vmem>>, vector<1x1x256xf32>,
    %61 = vector.extract_strided_slice %5 {offsets = [1, 3, 0], sizes = [1, 1, 256], strides = [1, 1, 1]} : vector<3x8x256xf32> to vector<1x1x256xf32>
    %cst_29 = arith.constant 2.000000e+00 : f32
    %62 = vector.broadcast %cst_29 : f32 to vector<1x1x256xf32>
    %63 = arith.mulf %61, %62 : vector<1x1x256xf32>
    %64 = arith.mulf %63, %63 : vector<1x1x256xf32>
    %cst_30 = arith.constant 3.000000e+01 : f32
    %65 = vector.broadcast %cst_30 : f32 to vector<1x1x256xf32>
    %66 = arith.mulf %64, %65 : vector<1x1x256xf32>
    %c1_31 = arith.constant 1 : index
    %c3_32 = arith.constant 3 : index
    %c0_33 = arith.constant 0 : index
    %67 = vector.load %arg5[%c1_31, %c3_32, %c0_33] : memref<3x8x256xf32, #tpu.memory_space<vmem>>, vector<1x1x256xf32>
    tpu.vector_store %arg5[%c1_31, %c3_32, %c0_33], %66 {strides = array<i32>} : memref<3x8x256xf32, #tpu.memory_space<vmem>>, vector<1x1x256xf32>,
    %68 = vector.extract_strided_slice %5 {offsets = [2, 2, 0], sizes = [1, 1, 256], strides = [1, 1, 1]} : vector<3x8x256xf32> to vector<1x1x256xf32>
    %cst_34 = arith.constant 2.000000e+00 : f32
    %69 = vector.broadcast %cst_34 : f32 to vector<1x1x256xf32>
    %70 = arith.mulf %68, %69 : vector<1x1x256xf32>
    %71 = arith.mulf %70, %70 : vector<1x1x256xf32>
    %cst_35 = arith.constant 3.300000e+01 : f32
    %72 = vector.broadcast %cst_35 : f32 to vector<1x1x256xf32>
    %73 = arith.mulf %71, %72 : vector<1x1x256xf32>
    %c2_36 = arith.constant 2 : index
    %c2_37 = arith.constant 2 : index
    %c0_38 = arith.constant 0 : index
    %74 = vector.load %arg5[%c2_36, %c2_37, %c0_38] : memref<3x8x256xf32, #tpu.memory_space<vmem>>, vector<1x1x256xf32>
    tpu.vector_store %arg5[%c2_36, %c2_37, %c0_38], %73 {strides = array<i32>} : memref<3x8x256xf32, #tpu.memory_space<vmem>>, vector<1x1x256xf32>,
    %75 = vector.extract_strided_slice %5 {offsets = [2, 3, 0], sizes = [1, 1, 256], strides = [1, 1, 1]} : vector<3x8x256xf32> to vector<1x1x256xf32>
    %cst_39 = arith.constant 2.000000e+00 : f32
    %76 = vector.broadcast %cst_39 : f32 to vector<1x1x256xf32>
    %77 = arith.mulf %75, %76 : vector<1x1x256xf32>
    %78 = arith.mulf %77, %77 : vector<1x1x256xf32>
    %cst_40 = arith.constant 2.300000e+01 : f32
    %79 = vector.broadcast %cst_40 : f32 to vector<1x1x256xf32>
    %80 = arith.mulf %78, %79 : vector<1x1x256xf32>
    %c2_41 = arith.constant 2 : index
    %c3_42 = arith.constant 3 : index
    %c0_43 = arith.constant 0 : index
    %81 = vector.load %arg5[%c2_41, %c3_42, %c0_43] : memref<3x8x256xf32, #tpu.memory_space<vmem>>, vector<1x1x256xf32>
    tpu.vector_store %arg5[%c2_41, %c3_42, %c0_43], %80 {strides = array<i32>} : memref<3x8x256xf32, #tpu.memory_space<vmem>>, vector<1x1x256xf32>,
    %82 = vector.extract_strided_slice %5 {offsets = [0, 4, 0], sizes = [3, 4, 256], strides = [1, 1, 1]} : vector<3x8x256xf32> to vector<3x4x256xf32>
    %c0_44 = arith.constant 0 : index
    %c4 = arith.constant 4 : index
    %c0_45 = arith.constant 0 : index
    %83 = vector.load %arg5[%c0_44, %c4, %c0_45] : memref<3x8x256xf32, #tpu.memory_space<vmem>>, vector<3x4x256xf32>
    tpu.vector_store %arg5[%c0_44, %c4, %c0_45], %82 {strides = array<i32>} : memref<3x8x256xf32, #tpu.memory_space<vmem>>, vector<3x4x256xf32>,
    %c0_46 = arith.constant 0 : index
    %c0_47 = arith.constant 0 : index
    %c0_48 = arith.constant 0 : index
    %84 = vector.load %arg5[%c0_46, %c0_47, %c0_48] : memref<3x8x256xf32, #tpu.memory_space<vmem>>, vector<1x8x256xf32>
    %85 = vector.shape_cast %84 : vector<1x8x256xf32> to vector<8x256xf32>
    %86 = tpu.transpose %85, [1, 0] : vector<8x256xf32> -> vector<256x8xf32>
    %c0_49 = arith.constant 0 : index
    %c0_50 = arith.constant 0 : index
    %c0_51 = arith.constant 0 : index
    %87 = vector.load %arg3[%c0_49, %c0_50, %c0_51] : memref<3x256x8xf32, #tpu.memory_space<vmem>>, vector<1x256x8xf32>
    %88 = vector.shape_cast %87 : vector<1x256x8xf32> to vector<256x8xf32>
    %89 = vector.shape_cast %86 : vector<256x8xf32> to vector<1x256x8xf32>
    tpu.vector_store %arg3[%c0_49, %c0_50, %c0_51], %89 {strides = array<i32>} : memref<3x256x8xf32, #tpu.memory_space<vmem>>, vector<1x256x8xf32>,
    %c0_52 = arith.constant 0 : index
    %c0_53 = arith.constant 0 : index
    %c0_54 = arith.constant 0 : index
    %90 = vector.load %arg2[%c0_52, %c0_53, %c0_54] : memref<3x8x256xf32, #tpu.memory_space<vmem>>, vector<1x8x256xf32>
    %91 = vector.shape_cast %90 : vector<1x8x256xf32> to vector<8x256xf32>
    %92 = tpu.transpose %91, [1, 0] : vector<8x256xf32> -> vector<256x8xf32>
    %c0_55 = arith.constant 0 : index
    %c0_56 = arith.constant 0 : index
    %c0_57 = arith.constant 0 : index
    %93 = vector.load %arg4[%c0_55, %c0_56, %c0_57] : memref<3x256x8xf32, #tpu.memory_space<vmem>>, vector<1x256x8xf32>
    %94 = vector.shape_cast %93 : vector<1x256x8xf32> to vector<256x8xf32>
    %95 = vector.shape_cast %92 : vector<256x8xf32> to vector<1x256x8xf32>
    tpu.vector_store %arg4[%c0_55, %c0_56, %c0_57], %95 {strides = array<i32>} : memref<3x256x8xf32, #tpu.memory_space<vmem>>, vector<1x256x8xf32>,
    %c1_58 = arith.constant 1 : index
    %c0_59 = arith.constant 0 : index
    %c0_60 = arith.constant 0 : index
    %96 = vector.load %arg5[%c1_58, %c0_59, %c0_60] : memref<3x8x256xf32, #tpu.memory_space<vmem>>, vector<1x8x256xf32>
    %97 = vector.shape_cast %96 : vector<1x8x256xf32> to vector<8x256xf32>
    %98 = tpu.transpose %97, [1, 0] : vector<8x256xf32> -> vector<256x8xf32>
    %c1_61 = arith.constant 1 : index
    %c0_62 = arith.constant 0 : index
    %c0_63 = arith.constant 0 : index
    %99 = vector.load %arg3[%c1_61, %c0_62, %c0_63] : memref<3x256x8xf32, #tpu.memory_space<vmem>>, vector<1x256x8xf32>
    %100 = vector.shape_cast %99 : vector<1x256x8xf32> to vector<256x8xf32>
    %101 = vector.shape_cast %98 : vector<256x8xf32> to vector<1x256x8xf32>
    tpu.vector_store %arg3[%c1_61, %c0_62, %c0_63], %101 {strides = array<i32>} : memref<3x256x8xf32, #tpu.memory_space<vmem>>, vector<1x256x8xf32>,
    %c1_64 = arith.constant 1 : index
    %c0_65 = arith.constant 0 : index
    %c0_66 = arith.constant 0 : index
    %102 = vector.load %arg2[%c1_64, %c0_65, %c0_66] : memref<3x8x256xf32, #tpu.memory_space<vmem>>, vector<1x8x256xf32>
    %103 = vector.shape_cast %102 : vector<1x8x256xf32> to vector<8x256xf32>
    %104 = tpu.transpose %103, [1, 0] : vector<8x256xf32> -> vector<256x8xf32>
    %c1_67 = arith.constant 1 : index
    %c0_68 = arith.constant 0 : index
    %c0_69 = arith.constant 0 : index
    %105 = vector.load %arg4[%c1_67, %c0_68, %c0_69] : memref<3x256x8xf32, #tpu.memory_space<vmem>>, vector<1x256x8xf32>
    %106 = vector.shape_cast %105 : vector<1x256x8xf32> to vector<256x8xf32>
    %107 = vector.shape_cast %104 : vector<256x8xf32> to vector<1x256x8xf32>
    tpu.vector_store %arg4[%c1_67, %c0_68, %c0_69], %107 {strides = array<i32>} : memref<3x256x8xf32, #tpu.memory_space<vmem>>, vector<1x256x8xf32>,
    %c2_70 = arith.constant 2 : index
    %c0_71 = arith.constant 0 : index
    %c0_72 = arith.constant 0 : index
    %108 = vector.load %arg5[%c2_70, %c0_71, %c0_72] : memref<3x8x256xf32, #tpu.memory_space<vmem>>, vector<1x8x256xf32>
    %109 = vector.shape_cast %108 : vector<1x8x256xf32> to vector<8x256xf32>
    %110 = tpu.transpose %109, [1, 0] : vector<8x256xf32> -> vector<256x8xf32>
    %c2_73 = arith.constant 2 : index
    %c0_74 = arith.constant 0 : index
    %c0_75 = arith.constant 0 : index
    %111 = vector.load %arg3[%c2_73, %c0_74, %c0_75] : memref<3x256x8xf32, #tpu.memory_space<vmem>>, vector<1x256x8xf32>
    %112 = vector.shape_cast %111 : vector<1x256x8xf32> to vector<256x8xf32>
    %113 = vector.shape_cast %110 : vector<256x8xf32> to vector<1x256x8xf32>
    tpu.vector_store %arg3[%c2_73, %c0_74, %c0_75], %113 {strides = array<i32>} : memref<3x256x8xf32, #tpu.memory_space<vmem>>, vector<1x256x8xf32>,
    %c2_76 = arith.constant 2 : index
    %c0_77 = arith.constant 0 : index
    %c0_78 = arith.constant 0 : index
    %114 = vector.load %arg2[%c2_76, %c0_77, %c0_78] : memref<3x8x256xf32, #tpu.memory_space<vmem>>, vector<1x8x256xf32>
    %115 = vector.shape_cast %114 : vector<1x8x256xf32> to vector<8x256xf32>
    %116 = tpu.transpose %115, [1, 0] : vector<8x256xf32> -> vector<256x8xf32>
    %c2_79 = arith.constant 2 : index
    %c0_80 = arith.constant 0 : index
    %c0_81 = arith.constant 0 : index
    %117 = vector.load %arg4[%c2_79, %c0_80, %c0_81] : memref<3x256x8xf32, #tpu.memory_space<vmem>>, vector<1x256x8xf32>
    %118 = vector.shape_cast %117 : vector<1x256x8xf32> to vector<256x8xf32>
    %119 = vector.shape_cast %116 : vector<256x8xf32> to vector<1x256x8xf32>
    tpu.vector_store %arg4[%c2_79, %c0_80, %c0_81], %119 {strides = array<i32>} : memref<3x256x8xf32, #tpu.memory_space<vmem>>, vector<1x256x8xf32>,
    return
  }
  func.func @transform_0(%arg0: i32, %arg1: i32) -> (i32, i32, i32) {
    %c0_i32 = arith.constant 0 : i32
    %c0_i32_0 = arith.constant 0 : i32
    return %arg0, %c0_i32, %arg1 : i32, i32, i32
  }
  func.func @transform_1(%arg0: i32, %arg1: i32) -> (i32, i32, i32) {
    %c0_i32 = arith.constant 0 : i32
    %c0_i32_0 = arith.constant 0 : i32
    return %arg0, %arg1, %c0_i32 : i32, i32, i32
  }
  func.func @transform_2(%arg0: i32, %arg1: i32) -> (i32, i32, i32) {
    %c0_i32 = arith.constant 0 : i32
    %c0_i32_0 = arith.constant 0 : i32
    return %arg0, %arg1, %c0_i32 : i32, i32, i32
  }
}

</mosaic_0001>

<llo_original>
// kernel: tpu_custom_call.1
$region0: #{tpu_custom_call.1}
  #allocation0 [shape = 'u32[]', space=smem, size = 0x4, offset = 0x4, fixed_abs, tag = 'smem constant byte address 0x4 - core index']
  #allocation1 [shape = 'u32[144,128]{1,0:T(1,128)}', space=vmem, size = 0x12000, scoped, tag = 'internal scratch']
  #allocation2 [shape = 'f32[3,8,256]{2,1,0:T(8,128)}', space=vmem, size = 0x6000, scoped, tag = 'scratch operand']
  %s0 = inlined_call_operand.hbm [shape: f32[6,8,256], index: 0, kind: input, shape index: {}]
  %s1 = inlined_call_operand.vmem [shape: f32[6,256,8], index: 1, kind: output, shape index: {0}]
  %s2 = inlined_call_operand.vmem [shape: f32[6,256,8], index: 2, kind: output, shape index: {1}]
  %3 = xla_tuple %s1, %s2
  %s4 = sld [smem:[#allocation0]]
  $region49: #{tpu_custom_call.1} parent=0
    _
  %s6 = ssub.s32 1, %s4
  %s7 = scalar_select 0, %s6, %s4
  $region1: #{tpu_custom_call.1} parent=0
    #allocation3 [shape = 'u8[49152]{0}', space=vmem, size = 0xc000, scoped, tag = 'input window, operand 0']
    #allocation4 [shape = 's32[2]{0}', space=sflag, size = 0x8, scoped, tag = 'scoped memory for tpu_custom_call.1']
    %8 = vsyncpa [#allocation4], 0
    %s9 = scalar_lea.sflag [#allocation4], 1
    %10 = vsyncpa %s9, 0
    loop: start=0, step=1, limit=4
    $region2: #{tpu_custom_call.1} parent=1 // loop_pre_header
      _
    $region3: #{tpu_custom_call.1} parent=1 // loop_header
      %s12 = sphi 0, %s16
      %p13 = scmp.ge.s32.totalorder %s12, 4
      %s19 = sphi 0, %s31
      %s20 = sphi 0, %s27
      %s21 = sphi 0, %s19
      %s22 = sphi 0, %s20
      %s23 = sphi 0, %s21
      %s24 = sphi 0, %s22
      %s36 = sphi 0, %s38
      %s39 = sphi 0, %s36
      %s40 = sphi 0, %s39
      %s56 = sphi 0, %s40
      %s64 = sphi 0, %s66
      %s67 = sphi 0, %s64
      %s68 = sphi 0, %s67
      %s84 = sphi 0, %s68
      %s92 = sphi 0, %s94
      %s95 = sphi 0, %s92
      %s96 = sphi 0, %s95
      %s112 = sphi 0, %s96
    $region4: #{tpu_custom_call.1} parent=1 // loop_header_branch
      %15 = sbr.rel (%p13) target = $region8
    $region5: #{tpu_custom_call.1} parent=1 // loop_body
      %s17 = ssub.s32 %s12, 1
      %s18 = ssub.s32 %s12, 2
      %s25 = sadd.s32 1, %s20
      %p26 = scmp.ge.s32.totalorder %s25, 1
      %s27 = scalar_select %p26, 0, %s25
      %s28 = sadd.s32 1, %s19
      %s29 = scalar_select %p26, %s28, %s19
      %p30 = scmp.ge.s32.totalorder %s29, 2
      %s31 = scalar_select %p30, 0, %s29
      %s32 = ssub.s32 %s19, %s31
      %s33 = ssub.s32 %s20, %s27
      %s34 = sor.u32 %s32, %s33
      %p35 = scmp.eq.s32.totalorder %s34, 0
      %s37 = sadd.s32 %s36, 1
      %s38 = scalar_select %p35, %s36, %s37
      %p41 = pneg %p35
      %p42 = scmp.eq.s32.totalorder %s12, 1
      %p43 = por %p41, %p42
      %p44 = scmp.ne.s32.totalorder %s36, %s39
      %p45 = scmp.eq.s32.totalorder %s12, 0
      %p46 = por %p44, %p45
      %p47 = scmp.ne.s32.totalorder %s36, %s39
      %p48 = scmp.eq.s32.totalorder %s17, 1
      %p49 = por %p47, %p48
      %p50 = scmp.ne.s32.totalorder %s39, %s40
      %p51 = scmp.eq.s32.totalorder %s17, 0
      %p52 = por %p50, %p51
      %p53 = scmp.ne.s32.totalorder %s39, %s40
      %p54 = scmp.eq.s32.totalorder %s18, 1
      %p55 = por %p53, %p54
      %p57 = scmp.ne.s32.totalorder %s40, %s56
      %p58 = scmp.eq.s32.totalorder %s18, 0
      %p59 = por %p57, %p58
      %s60 = ssub.s32 %s19, %s31
      %s61 = ssub.s32 %s20, %s27
      %s62 = sor.u32 %s60, %s61
      %p63 = scmp.eq.s32.totalorder %s62, 0
      %s65 = sadd.s32 %s64, 1
      %s66 = scalar_select %p63, %s64, %s65
      %p69 = pneg %p63
      %p70 = scmp.eq.s32.totalorder %s12, 1
      %p71 = por %p69, %p70
      %p72 = scmp.ne.s32.totalorder %s64, %s67
      %p73 = scmp.eq.s32.totalorder %s12, 0
      %p74 = por %p72, %p73
      %p75 = scmp.ne.s32.totalorder %s64, %s67
      %p76 = scmp.eq.s32.totalorder %s17, 1
      %p77 = por %p75, %p76
      %p78 = scmp.ne.s32.totalorder %s67, %s68
      %p79 = scmp.eq.s32.totalorder %s17, 0
      %p80 = por %p78, %p79
      %p81 = scmp.ne.s32.totalorder %s67, %s68
      %p82 = scmp.eq.s32.totalorder %s18, 1
      %p83 = por %p81, %p82
      %p85 = scmp.ne.s32.totalorder %s68, %s84
      %p86 = scmp.eq.s32.totalorder %s18, 0
      %p87 = por %p85, %p86
      %s88 = ssub.s32 %s19, %s31
      %s89 = ssub.s32 %s20, %s27
      %s90 = sor.u32 %s88, %s89
      %p91 = scmp.eq.s32.totalorder %s90, 0
      %s93 = sadd.s32 %s92, 1
      %s94 = scalar_select %p91, %s92, %s93
      %p97 = pneg %p91
      %p98 = scmp.eq.s32.totalorder %s12, 1
      %p99 = por %p97, %p98
      %p100 = scmp.ne.s32.totalorder %s92, %s95
      %p101 = scmp.eq.s32.totalorder %s12, 0
      %p102 = por %p100, %p101
      %p103 = scmp.ne.s32.totalorder %s92, %s95
      %p104 = scmp.eq.s32.totalorder %s17, 1
      %p105 = por %p103, %p104
      %p106 = scmp.ne.s32.totalorder %s95, %s96
      %p107 = scmp.eq.s32.totalorder %s17, 0
      %p108 = por %p106, %p107
      %p109 = scmp.ne.s32.totalorder %s95, %s96
      %p110 = scmp.eq.s32.totalorder %s18, 1
      %p111 = por %p109, %p110
      %p113 = scmp.ne.s32.totalorder %s96, %s112
      %p114 = scmp.eq.s32.totalorder %s18, 0
      %p115 = por %p113, %p114
      %p116 = scmp.le.s32.totalorder 1, %s12
      %p117 = scmp.lt.s32.totalorder %s12, 3
      %p118 = pnand %p116, %p117
      %p119 = pneg %p118
      // Predicated region
      $region9: #{tpu_custom_call.1} parent=5 // pred_check
        _
      $region10: #{tpu_custom_call.1} parent=5 // pred_check_branch
        %121 = sbr.rel (%p118) target = $region12
      $region11: #{tpu_custom_call.1} parent=5 // pred_region
        %s122 = ssub.s32 %s12, 1
      $region12: #{tpu_custom_call.1} parent=5 // pred_fallthru
        _
      %p123 = scmp.lt.s32.totalorder %s12, 2
      // Predicated region
      $region13: #{tpu_custom_call.1} parent=5 // pred_check
        %p124 = pneg %p123
      $region14: #{tpu_custom_call.1} parent=5 // pred_check_branch
        %126 = sbr.rel (%p124) target = $region16
      $region15: #{tpu_custom_call.1} parent=5 // pred_region
        // Predicated region
        $region17: #{tpu_custom_call.1} parent=15 // pred_check
          %p127 = pneg %p46
        $region18: #{tpu_custom_call.1} parent=15 // pred_check_branch
          %129 = sbr.rel (%p127) target = $region20
        $region19: #{tpu_custom_call.1} parent=15 // pred_region
          %s130 = sand.u32 %s36, 1
          %s131 = scalar_lea.sflag [#allocation4], %s130
          %s132 = sand.u32 %s36, 1
          %s133 = smul.addr %s132, 48
          %s134 = scalar_lea.vmem [#allocation3], %s133
          %s135 = smul.u32 3, %s19
          %s136 = smul.u32 2, %s20
          %s138 = ssub.s32 768, 768
          %139 = vsyncadd %s131, %s138
          %s140 = smul.addr %s135, 2
          %s141 = sadd.s32 %s136, %s140
          %s142 = smul.addr %s141, 128
          %s143 = scalar_lea.hbm %s0, %s142
          %s144 = sshll.u32 %s134, 4
          %s145 = int_to_ptr.vmem [resolvable:$true] %s144
          %150 = dma.hbm_to_vmem [thread:$0]  %s143, 768, %s145, %s131, 256, 256, 16
        $region20: #{tpu_custom_call.1} parent=15 // pred_fallthru
          _
      $region16: #{tpu_custom_call.1} parent=5 // pred_fallthru
        _
      %p151 = scmp.le.s32.totalorder 1, %s12
      %p152 = scmp.lt.s32.totalorder %s12, 3
      %p153 = pnand %p151, %p152
      %p154 = pneg %p153
      // Predicated region
      $region21: #{tpu_custom_call.1} parent=5 // pred_check
        _
      $region22: #{tpu_custom_call.1} parent=5 // pred_check_branch
        %156 = sbr.rel (%p153) target = $region24
      $region23: #{tpu_custom_call.1} parent=5 // pred_region
        %s157 = ssub.s32 %s12, 1
        %s158 = sand.u32 %s39, 1
        %s159 = scalar_lea.sflag [#allocation4], %s158
        %s160 = sand.u32 %s39, 1
        %s161 = smul.addr %s160, 48
        %s162 = scalar_lea.vmem [#allocation3], %s161
        // Predicated region
        $region25: #{tpu_custom_call.1} parent=23 // pred_check
          %p163 = pneg %p52
        $region26: #{tpu_custom_call.1} parent=23 // pred_check_branch
          %165 = sbr.rel (%p163) target = $region28
        $region27: #{tpu_custom_call.1} parent=23 // pred_region
          %166 = dma.done %s159, 768
        $region28: #{tpu_custom_call.1} parent=23 // pred_fallthru
          _
        %s167 = sand.u32 %s39, 1
        %s168 = scalar_lea.sflag [#allocation4], %s167
        %s169 = sand.u32 %s39, 1
        %s170 = smul.addr %s169, 48
        %s171 = scalar_lea.vmem [#allocation3], %s170
        %p172 = pneg %p52
        %p173 = pneg %p49
        %p174 = pneg %p80
        %p175 = pneg %p77
        %s176 = smul.u32 3, %s21
        %s177 = smul.u32 32, %s22
        %p178 = scmp.lt.s32.totalorder %s176, 5
        %s179 = scalar_select %p178, %s176, 5
        %p180 = scmp.lt.s32.totalorder %s177, 31
        %s181 = scalar_select %p180, %s177, 31
        %s182 = smul.addr %s179, 32
        %s183 = sadd.s32 %s181, %s182
        %s184 = smul.addr %s183, 8
        %s185 = scalar_lea.vmem %s1, %s184
        %p186 = pneg %p108
        %p187 = pneg %p105
        %s188 = smul.u32 3, %s21
        %s189 = smul.u32 32, %s22
        %p190 = scmp.lt.s32.totalorder %s188, 5
        %s191 = scalar_select %p190, %s188, 5
        %p192 = scmp.lt.s32.totalorder %s189, 31
        %s193 = scalar_select %p192, %s189, 31
        %s194 = smul.addr %s191, 32
        %s195 = sadd.s32 %s193, %s194
        %s196 = smul.addr %s195, 8
        %s197 = scalar_lea.vmem %s2, %s196
        %s198 = smul.u32 3, %s21
        %s199 = smul.u32 2, %s22
        %s200 = smul.u32 3, %s21
        %s201 = smul.u32 32, %s22
        %p202 = scmp.lt.s32.totalorder %s200, 5
        %s203 = scalar_select %p202, %s200, 5
        %p204 = scmp.lt.s32.totalorder %s201, 31
        %s205 = scalar_select %p204, %s201, 31
        %s206 = smul.addr %s203, 32
        %s207 = sadd.s32 %s205, %s206
        %s208 = smul.addr %s207, 8
        %s209 = scalar_lea.vmem %s1, %s208
        %s210 = smul.u32 3, %s21
        %s211 = smul.u32 32, %s22
        %s212 = smul.u32 3, %s21
        %s213 = smul.u32 32, %s22
        %p214 = scmp.lt.s32.totalorder %s212, 5
        %s215 = scalar_select %p214, %s212, 5
        %p216 = scmp.lt.s32.totalorder %s213, 31
        %s217 = scalar_select %p216, %s213, 31
        %s218 = smul.addr %s215, 32
        %s219 = sadd.s32 %s217, %s218
        %s220 = smul.addr %s219, 8
        %s221 = scalar_lea.vmem %s2, %s220
        %s222 = smul.u32 3, %s21
        %s223 = smul.u32 32, %s22
        %v224 = vld [vmem:[%s162] sm:$0xff]
        %v225 = vld [vmem:[%s162 + $0x8] sm:$0xff]
        %v226 = vld [vmem:[%s162 + $0x10] sm:$0xff]
        %v227 = vld [vmem:[%s162 + $0x18] sm:$0xff]
        %v228 = vld [vmem:[%s162 + $0x20] sm:$0xff]
        %v229 = vld [vmem:[%s162 + $0x28] sm:$0xff]
        %v230 = vxor.u32 %v224, 2147483648
        %v231 = vxor.u32 %v225, 2147483648
        %v232 = vxor.u32 %v226, 2147483648
        %v233 = vxor.u32 %v227, 2147483648
        %v234 = vxor.u32 %v228, 2147483648
        %v235 = vxor.u32 %v229, 2147483648
        %v236 = vmul.f32 %v230, 1.442695
        %v237 = vpow.pop %v236
        %v238 = vmul.f32 %v231, 1.442695
        %v239 = vpow.pop %v238
        %v240 = vmul.f32 %v232, 1.442695
        %v241 = vpow.pop %v240
        %v242 = vmul.f32 %v233, 1.442695
        %v243 = vpow.pop %v242
        %v244 = vmul.f32 %v234, 1.442695
        %v245 = vpow.pop %v244
        %v246 = vmul.f32 %v235, 1.442695
        %v247 = vpow.pop %v246
        %v248 = vadd.f32 %v237, 1.0
        %v249 = vadd.f32 %v239, 1.0
        %v250 = vadd.f32 %v241, 1.0
        %v251 = vadd.f32 %v243, 1.0
        %v252 = vadd.f32 %v245, 1.0
        %v253 = vadd.f32 %v247, 1.0
        %v254 = vrcp.pop %v248
        %v255 = vmul.f32 1.0, %v254
        %v256 = vrcp.pop %v249
        %v257 = vmul.f32 1.0, %v256
        %v258 = vrcp.pop %v250
        %v259 = vmul.f32 1.0, %v258
        %v260 = vrcp.pop %v251
        %v261 = vmul.f32 1.0, %v260
        %v262 = vrcp.pop %v252
        %v263 = vmul.f32 1.0, %v262
        %v264 = vrcp.pop %v253
        %v265 = vmul.f32 1.0, %v264
        %s266 = smul.u32 %s22, 256
        %s267 = scvt.s32.f32 %s266
        %v268 = vlaneseq
        %v269 = vand.u32 %v268, 127
        %v270 = vadd.s32 %v269, 128
        %v271 = vcvt.s32.f32 %v269
        %v272 = vcvt.s32.f32 %v270
        %v273 = vstv %s267
        %v274 = vadd.f32 %v273, %v271
        %v275 = vadd.f32 %v273, %v272
        %v276 = vadd.f32 %v274, 0.5
        %v277 = vadd.f32 %v275, 0.5
        %v278 = vmul.f32 %v276, 0.0625
        %v279 = vmul.f32 %v277, 0.0625
        %v280 = vfloor.f32 %v278
        %v281 = vfloor.f32 %v279
        %v282 = vmul.f32 %v280, 16.0
        %v283 = vmul.f32 %v281, 16.0
        %v284 = vsub.f32 %v274, %v282
        %v285 = vsub.f32 %v275, %v283
        %v286 = vmul.f32 %v255, 2.0
        %v287 = vmul.f32 %v257, 2.0
        %v288 = vmul.f32 %v259, 2.0
        %v289 = vmul.f32 %v261, 2.0
        %v290 = vmul.f32 %v263, 2.0
        %v291 = vmul.f32 %v265, 2.0
        %v292 = vsub.f32 %v286, 0.5
        %v293 = vsub.f32 %v287, 0.5
        %v294 = vsub.f32 %v288, 0.5
        %v295 = vsub.f32 %v289, 0.5
        %v296 = vsub.f32 %v290, 0.5
        %v297 = vsub.f32 %v291, 0.5
        %v298 = vadd.f32 %v292, %v284
        %v299 = vadd.f32 %v293, %v285
        %v300 = vadd.f32 %v294, %v284
        %v301 = vadd.f32 %v295, %v285
        %v302 = vadd.f32 %v296, %v284
        %v303 = vadd.f32 %v297, %v285
        %v304 = vmul.f32 %v298, 8.0
        %v305 = vmul.f32 %v299, 8.0
        %v306 = vmul.f32 %v300, 8.0
        %v307 = vmul.f32 %v301, 8.0
        %v308 = vmul.f32 %v302, 8.0
        %v309 = vmul.f32 %v303, 8.0
        %v316 = vcombine.low %v304, %v305
        %v318 = vunpack.c.l.s4 1966171168
        %v319 = vunpack.c.0.s8 %v318
        %v320 = vlaneseq
        %v321 = vshrl.u32 %v320, 7
        %v322 = vsub.s32 %v319, %v321
        %v323 = vrot.slane %v316, %v322
        %v325 = vunpack.c.l.s4 1966171168
        %v326 = vunpack.c.0.s8 %v325
        %v327 = vlaneseq
        %v328 = vshrl.u32 %v327, 7
        %v329 = vsub.s32 %v326, %v328
        %v330 = vrot.slane %v323, %v329
        %v331 = vcombine.low %v306, %v307
        %v333 = vunpack.c.l.s4 1966171168
        %v334 = vunpack.c.0.s8 %v333
        %v335 = vlaneseq
        %v336 = vshrl.u32 %v335, 7
        %v337 = vsub.s32 %v334, %v336
        %v338 = vrot.slane %v331, %v337
        %v340 = vunpack.c.l.s4 1966171168
        %v341 = vunpack.c.0.s8 %v340
        %v342 = vlaneseq
        %v343 = vshrl.u32 %v342, 7
        %v344 = vsub.s32 %v341, %v343
        %v345 = vrot.slane %v338, %v344
        %v346 = vcombine.low %v308, %v309
        %v348 = vunpack.c.l.s4 1966171168
        %v349 = vunpack.c.0.s8 %v348
        %v350 = vlaneseq
        %v351 = vshrl.u32 %v350, 7
        %v352 = vsub.s32 %v349, %v351
        %v353 = vrot.slane %v346, %v352
        %v355 = vunpack.c.l.s4 1966171168
        %v356 = vunpack.c.0.s8 %v355
        %v357 = vlaneseq
        %v358 = vshrl.u32 %v357, 7
        %v359 = vsub.s32 %v356, %v358
        %v360 = vrot.slane %v353, %v359
        %v364 = vlaneseq
        %vm365 = vcmp.ge.s32.totalorder %v364, 0
        %vm366 = vcmp.lt.s32.totalorder %v364, 256
        %vm367 = vmand %vm365, %vm366
        %368 = vst.msk [vmem:[#allocation2] ss:$8 sm:$0x3] %vm367, %v330
        %369 = vst.msk [vmem:[#allocation2] ss:$8 sm:$0x0] %vm367, %v330
        %s370 = scalar_lea.vmem [#allocation2], 16
        %371 = vst.msk [vmem:[%s370] ss:$8 sm:$0x3] %vm367, %v345
        %372 = vst.msk [vmem:[%s370] ss:$8 sm:$0x0] %vm367, %v345
        %s373 = scalar_lea.vmem [#allocation2], 32
        %374 = vst.msk [vmem:[%s373] ss:$8 sm:$0x3] %vm367, %v360
        %375 = vst.msk [vmem:[%s373] ss:$8 sm:$0x0] %vm367, %v360
        %v376 = vadd.f32 %v292, %v280
        %v377 = vadd.f32 %v293, %v281
        %v378 = vadd.f32 %v294, %v280
        %v379 = vadd.f32 %v295, %v281
        %v380 = vadd.f32 %v296, %v280
        %v381 = vadd.f32 %v297, %v281
        %v382 = vmul.f32 %v376, 8.0
        %v383 = vmul.f32 %v377, 8.0
        %v384 = vmul.f32 %v378, 8.0
        %v385 = vmul.f32 %v379, 8.0
        %v386 = vmul.f32 %v380, 8.0
        %v387 = vmul.f32 %v381, 8.0
        %v394 = vcombine.low %v382, %v383
        %v396 = vunpack.c.l.s4 1966171168
        %v397 = vunpack.c.0.s8 %v396
        %v398 = vlaneseq
        %v399 = vshrl.u32 %v398, 7
        %v400 = vsub.s32 %v397, %v399
        %v401 = vrot.slane %v394, %v400
        %v402 = vcombine.high %v401, %v401
        %v404 = vunpack.c.l.s4 1966171168
        %v405 = vunpack.c.0.s8 %v404
        %v406 = vlaneseq
        %v407 = vshrl.u32 %v406, 7
        %v408 = vsub.s32 %v405, %v407
        %v409 = vrot.slane %v402, %v408
        %v410 = vcombine.low %v384, %v385
        %v412 = vunpack.c.l.s4 1966171168
        %v413 = vunpack.c.0.s8 %v412
        %v414 = vlaneseq
        %v415 = vshrl.u32 %v414, 7
        %v416 = vsub.s32 %v413, %v415
        %v417 = vrot.slane %v410, %v416
        %v418 = vcombine.high %v417, %v417
        %v420 = vunpack.c.l.s4 1966171168
        %v421 = vunpack.c.0.s8 %v420
        %v422 = vlaneseq
        %v423 = vshrl.u32 %v422, 7
        %v424 = vsub.s32 %v421, %v423
        %v425 = vrot.slane %v418, %v424
        %v426 = vcombine.low %v386, %v387
        %v428 = vunpack.c.l.s4 1966171168
        %v429 = vunpack.c.0.s8 %v428
        %v430 = vlaneseq
        %v431 = vshrl.u32 %v430, 7
        %v432 = vsub.s32 %v429, %v431
        %v433 = vrot.slane %v426, %v432
        %v434 = vcombine.high %v433, %v433
        %v436 = vunpack.c.l.s4 1966171168
        %v437 = vunpack.c.0.s8 %v436
        %v438 = vlaneseq
        %v439 = vshrl.u32 %v438, 7
        %v440 = vsub.s32 %v437, %v439
        %v441 = vrot.slane %v434, %v440
        %s445 = scalar_lea.vmem [#allocation2], 1
        %446 = vst.msk [vmem:[%s445] ss:$8 sm:$0x3] %vm367, %v409
        %447 = vst.msk [vmem:[%s445] ss:$8 sm:$0x0] %vm367, %v409
        %s448 = scalar_lea.vmem [#allocation2], 17
        %449 = vst.msk [vmem:[%s448] ss:$8 sm:$0x3] %vm367, %v425
        %450 = vst.msk [vmem:[%s448] ss:$8 sm:$0x0] %vm367, %v425
        %s451 = scalar_lea.vmem [#allocation2], 33
        %452 = vst.msk [vmem:[%s451] ss:$8 sm:$0x3] %vm367, %v441
        %453 = vst.msk [vmem:[%s451] ss:$8 sm:$0x0] %vm367, %v441
        %v454 = vmul.f32 %v286, %v286
        %v455 = vmul.f32 %v287, %v287
        %v456 = vmul.f32 %v454, 10.0
        %v457 = vmul.f32 %v455, 10.0
        %v460 = vcombine.low %v456, %v457
        %v462 = vunpack.c.l.s4 1966171168
        %v463 = vunpack.c.0.s8 %v462
        %v464 = vlaneseq
        %v465 = vshrl.u32 %v464, 7
        %v466 = vsub.s32 %v463, %v465
        %v467 = vrot.slane %v460, %v466
        %v469 = vunpack.c.l.s4 1966171168
        %v470 = vunpack.c.0.s8 %v469
        %v471 = vlaneseq
        %v472 = vshrl.u32 %v471, 7
        %v473 = vsub.s32 %v470, %v472
        %v474 = vrot.slane %v467, %v473
        %v475 = vcombine.high %v474, %v474
        %s477 = scalar_lea.vmem [#allocation2], 2
        %478 = vst.msk [vmem:[%s477] ss:$8 sm:$0x3] %vm367, %v475
        %479 = vst.msk [vmem:[%s477] ss:$8 sm:$0x0] %vm367, %v475
        %v480 = vmul.f32 %v454, 13.0
        %v481 = vmul.f32 %v455, 13.0
        %v484 = vcombine.low %v480, %v481
        %v486 = vunpack.c.l.s4 1966171168
        %v487 = vunpack.c.0.s8 %v486
        %v488 = vlaneseq
        %v489 = vshrl.u32 %v488, 7
        %v490 = vsub.s32 %v487, %v489
        %v491 = vrot.slane %v484, %v490
        %v492 = vcombine.high %v491, %v491
        %v494 = vunpack.c.l.s4 1966171168
        %v495 = vunpack.c.0.s8 %v494
        %v496 = vlaneseq
        %v497 = vshrl.u32 %v496, 7
        %v498 = vsub.s32 %v495, %v497
        %v499 = vrot.slane %v492, %v498
        %v500 = vcombine.high %v499, %v499
        %s502 = scalar_lea.vmem [#allocation2], 3
        %503 = vst.msk [vmem:[%s502] ss:$8 sm:$0x3] %vm367, %v500
        %504 = vst.msk [vmem:[%s502] ss:$8 sm:$0x0] %vm367, %v500
        %v505 = vmul.f32 %v288, %v288
        %v506 = vmul.f32 %v289, %v289
        %v507 = vmul.f32 %v505, 16.0
        %v508 = vmul.f32 %v506, 16.0
        %v511 = vcombine.low %v507, %v508
        %v513 = vunpack.c.l.s4 1966171168
        %v514 = vunpack.c.0.s8 %v513
        %v515 = vlaneseq
        %v516 = vshrl.u32 %v515, 7
        %v517 = vsub.s32 %v514, %v516
        %v518 = vrot.slane %v511, %v517
        %v520 = vunpack.c.l.s4 1966171168
        %v521 = vunpack.c.0.s8 %v520
        %v522 = vlaneseq
        %v523 = vshrl.u32 %v522, 7
        %v524 = vsub.s32 %v521, %v523
        %v525 = vrot.slane %v518, %v524
        %v526 = vcombine.high %v525, %v525
        %s528 = scalar_lea.vmem [#allocation2], 16
        %s529 = scalar_lea.vmem %s528, 2 [#allocation2]
        %530 = vst.msk [vmem:[%s529] ss:$8 sm:$0x3] %vm367, %v526
        %531 = vst.msk [vmem:[%s529] ss:$8 sm:$0x0] %vm367, %v526
        %v532 = vmul.f32 %v505, 30.0
        %v533 = vmul.f32 %v506, 30.0
        %v536 = vcombine.low %v532, %v533
        %v538 = vunpack.c.l.s4 1966171168
        %v539 = vunpack.c.0.s8 %v538
        %v540 = vlaneseq
        %v541 = vshrl.u32 %v540, 7
        %v542 = vsub.s32 %v539, %v541
        %v543 = vrot.slane %v536, %v542
        %v544 = vcombine.high %v543, %v543
        %v546 = vunpack.c.l.s4 1966171168
        %v547 = vunpack.c.0.s8 %v546
        %v548 = vlaneseq
        %v549 = vshrl.u32 %v548, 7
        %v550 = vsub.s32 %v547, %v549
        %v551 = vrot.slane %v544, %v550
        %v552 = vcombine.high %v551, %v551
        %s554 = scalar_lea.vmem %s528, 3 [#allocation2]
        %555 = vst.msk [vmem:[%s554] ss:$8 sm:$0x3] %vm367, %v552
        %556 = vst.msk [vmem:[%s554] ss:$8 sm:$0x0] %vm367, %v552
        %v557 = vmul.f32 %v290, %v290
        %v558 = vmul.f32 %v291, %v291
        %v559 = vmul.f32 %v557, 33.0
        %v560 = vmul.f32 %v558, 33.0
        %v563 = vcombine.low %v559, %v560
        %v565 = vunpack.c.l.s4 1966171168
        %v566 = vunpack.c.0.s8 %v565
        %v567 = vlaneseq
        %v568 = vshrl.u32 %v567, 7
        %v569 = vsub.s32 %v566, %v568
        %v570 = vrot.slane %v563, %v569
        %v572 = vunpack.c.l.s4 1966171168
        %v573 = vunpack.c.0.s8 %v572
        %v574 = vlaneseq
        %v575 = vshrl.u32 %v574, 7
        %v576 = vsub.s32 %v573, %v575
        %v577 = vrot.slane %v570, %v576
        %v578 = vcombine.high %v577, %v577
        %s580 = scalar_lea.vmem [#allocation2], 32
        %s581 = scalar_lea.vmem %s580, 2 [#allocation2]
        %582 = vst.msk [vmem:[%s581] ss:$8 sm:$0x3] %vm367, %v578
        %583 = vst.msk [vmem:[%s581] ss:$8 sm:$0x0] %vm367, %v578
        %v584 = vmul.f32 %v557, 23.0
        %v585 = vmul.f32 %v558, 23.0
        %v588 = vcombine.low %v584, %v585
        %v590 = vunpack.c.l.s4 1966171168
        %v591 = vunpack.c.0.s8 %v590
        %v592 = vlaneseq
        %v593 = vshrl.u32 %v592, 7
        %v594 = vsub.s32 %v591, %v593
        %v595 = vrot.slane %v588, %v594
        %v596 = vcombine.high %v595, %v595
        %v598 = vunpack.c.l.s4 1966171168
        %v599 = vunpack.c.0.s8 %v598
        %v600 = vlaneseq
        %v601 = vshrl.u32 %v600, 7
        %v602 = vsub.s32 %v599, %v601
        %v603 = vrot.slane %v596, %v602
        %v604 = vcombine.high %v603, %v603
        %s606 = scalar_lea.vmem %s580, 3 [#allocation2]
        %607 = vst.msk [vmem:[%s606] ss:$8 sm:$0x3] %vm367, %v604
        %608 = vst.msk [vmem:[%s606] ss:$8 sm:$0x0] %vm367, %v604
        %609 = vst [vmem:[#allocation2] sm:$0xf0] %v255
        %610 = vst [vmem:[#allocation2 + $0x8] sm:$0xf0] %v257
        %611 = vst [vmem:[#allocation2 + $0x10] sm:$0xf0] %v259
        %612 = vst [vmem:[#allocation2 + $0x18] sm:$0xf0] %v261
        %613 = vst [vmem:[#allocation2 + $0x20] sm:$0xf0] %v263
        %614 = vst [vmem:[#allocation2 + $0x28] sm:$0xf0] %v265
        %v615 = vld [vmem:[#allocation2] sm:$0xff]
        %v616 = vld [vmem:[#allocation2 + $0x8] sm:$0xff]
        %617 = vxpose.xlu0.b32.start [1/16] %v615, 128
        %618 = vxpose.xlu0.b32.cont [2/16] 0.0, 128
        %619 = vxpose.xlu0.b32.cont [3/16] 0.0, 128
        %620 = vxpose.xlu0.b32.cont [4/16] 0.0, 128
        %621 = vxpose.xlu0.b32.cont [5/16] 0.0, 128
        %622 = vxpose.xlu0.b32.cont [6/16] 0.0, 128
        %623 = vxpose.xlu0.b32.cont [7/16] 0.0, 128
        %624 = vxpose.xlu0.b32.cont [8/16] 0.0, 128
        %625 = vxpose.xlu0.b32.cont [9/16] 0.0, 128
        %626 = vxpose.xlu0.b32.cont [10/16] 0.0, 128
        %627 = vxpose.xlu0.b32.cont [11/16] 0.0, 128
        %628 = vxpose.xlu0.b32.cont [12/16] 0.0, 128
        %629 = vxpose.xlu0.b32.cont [13/16] 0.0, 128
        %630 = vxpose.xlu0.b32.cont [14/16] 0.0, 128
        %631 = vxpose.xlu0.b32.cont [15/16] 0.0, 128
        %632 = vxpose.xlu0.b32.end [16/16] 0.0, 128
        %v633 = vpop.trf.xlu0
        %v634 = vpop.trf.xlu0
        %v635 = vpop.trf.xlu0
        %v636 = vpop.trf.xlu0
        %v637 = vpop.trf.xlu0
        %v638 = vpop.trf.xlu0
        %v639 = vpop.trf.xlu0
        %v640 = vpop.trf.xlu0
        %v641 = vpop.trf.xlu0
        %v642 = vpop.trf.xlu0
        %v643 = vpop.trf.xlu0
        %v644 = vpop.trf.xlu0
        %v645 = vpop.trf.xlu0
        %v646 = vpop.trf.xlu0
        %v647 = vpop.trf.xlu0
        %v648 = vpop.trf.xlu0
        %649 = vxpose.xlu0.b32.start [1/16] %v616, 128
        %650 = vxpose.xlu0.b32.cont [2/16] 0.0, 128
        %651 = vxpose.xlu0.b32.cont [3/16] 0.0, 128
        %652 = vxpose.xlu0.b32.cont [4/16] 0.0, 128
        %653 = vxpose.xlu0.b32.cont [5/16] 0.0, 128
        %654 = vxpose.xlu0.b32.cont [6/16] 0.0, 128
        %655 = vxpose.xlu0.b32.cont [7/16] 0.0, 128
        %656 = vxpose.xlu0.b32.cont [8/16] 0.0, 128
        %657 = vxpose.xlu0.b32.cont [9/16] 0.0, 128
        %658 = vxpose.xlu0.b32.cont [10/16] 0.0, 128
        %659 = vxpose.xlu0.b32.cont [11/16] 0.0, 128
        %660 = vxpose.xlu0.b32.cont [12/16] 0.0, 128
        %661 = vxpose.xlu0.b32.cont [13/16] 0.0, 128
        %662 = vxpose.xlu0.b32.cont [14/16] 0.0, 128
        %663 = vxpose.xlu0.b32.cont [15/16] 0.0, 128
        %664 = vxpose.xlu0.b32.end [16/16] 0.0, 128
        %v665 = vpop.trf.xlu0
        %v666 = vpop.trf.xlu0
        %v667 = vpop.trf.xlu0
        %v668 = vpop.trf.xlu0
        %v669 = vpop.trf.xlu0
        %v670 = vpop.trf.xlu0
        %v671 = vpop.trf.xlu0
        %v672 = vpop.trf.xlu0
        %v673 = vpop.trf.xlu0
        %v674 = vpop.trf.xlu0
        %v675 = vpop.trf.xlu0
        %v676 = vpop.trf.xlu0
        %v677 = vpop.trf.xlu0
        %v678 = vpop.trf.xlu0
        %v679 = vpop.trf.xlu0
        %v680 = vpop.trf.xlu0
        %vm681 = vcmask 64512
        %682 = vst.msk [vmem:[%s209] sm:$0xff] %vm681, %v633
        %683 = vst.msk [vmem:[%s209 + $0x8] sm:$0xff] %vm681, %v634
        %684 = vst.msk [vmem:[%s209 + $0x10] sm:$0xff] %vm681, %v635
        %685 = vst.msk [vmem:[%s209 + $0x18] sm:$0xff] %vm681, %v636
        %686 = vst.msk [vmem:[%s209 + $0x20] sm:$0xff] %vm681, %v637
        %687 = vst.msk [vmem:[%s209 + $0x28] sm:$0xff] %vm681, %v638
        %688 = vst.msk [vmem:[%s209 + $0x30] sm:$0xff] %vm681, %v639
        %689 = vst.msk [vmem:[%s209 + $0x38] sm:$0xff] %vm681, %v640
        %690 = vst.msk [vmem:[%s209 + $0x40] sm:$0xff] %vm681, %v641
        %691 = vst.msk [vmem:[%s209 + $0x48] sm:$0xff] %vm681, %v642
        %692 = vst.msk [vmem:[%s209 + $0x50] sm:$0xff] %vm681, %v643
        %693 = vst.msk [vmem:[%s209 + $0x58] sm:$0xff] %vm681, %v644
        %694 = vst.msk [vmem:[%s209 + $0x60] sm:$0xff] %vm681, %v645
        %695 = vst.msk [vmem:[%s209 + $0x68] sm:$0xff] %vm681, %v646
        %696 = vst.msk [vmem:[%s209 + $0x70] sm:$0xff] %vm681, %v647
        %697 = vst.msk [vmem:[%s209 + $0x78] sm:$0xff] %vm681, %v648
        %698 = vst.msk [vmem:[%s209 + $0x80] sm:$0xff] %vm681, %v665
        %699 = vst.msk [vmem:[%s209 + $0x88] sm:$0xff] %vm681, %v666
        %700 = vst.msk [vmem:[%s209 + $0x90] sm:$0xff] %vm681, %v667
        %701 = vst.msk [vmem:[%s209 + $0x98] sm:$0xff] %vm681, %v668
        %702 = vst.msk [vmem:[%s209 + $0xa0] sm:$0xff] %vm681, %v669
        %703 = vst.msk [vmem:[%s209 + $0xa8] sm:$0xff] %vm681, %v670
        %704 = vst.msk [vmem:[%s209 + $0xb0] sm:$0xff] %vm681, %v671
        %705 = vst.msk [vmem:[%s209 + $0xb8] sm:$0xff] %vm681, %v672
        %706 = vst.msk [vmem:[%s209 + $0xc0] sm:$0xff] %vm681, %v673
        %707 = vst.msk [vmem:[%s209 + $0xc8] sm:$0xff] %vm681, %v674
        %708 = vst.msk [vmem:[%s209 + $0xd0] sm:$0xff] %vm681, %v675
        %709 = vst.msk [vmem:[%s209 + $0xd8] sm:$0xff] %vm681, %v676
        %710 = vst.msk [vmem:[%s209 + $0xe0] sm:$0xff] %vm681, %v677
        %711 = vst.msk [vmem:[%s209 + $0xe8] sm:$0xff] %vm681, %v678
        %712 = vst.msk [vmem:[%s209 + $0xf0] sm:$0xff] %vm681, %v679
        %713 = vst.msk [vmem:[%s209 + $0xf8] sm:$0xff] %vm681, %v680
        %v714 = vld [vmem:[%s162] sm:$0xff]
        %v715 = vld [vmem:[%s162 + $0x8] sm:$0xff]
        %716 = vxpose.xlu0.b32.start [1/16] %v714, 128
        %717 = vxpose.xlu0.b32.cont [2/16] 0.0, 128
        %718 = vxpose.xlu0.b32.cont [3/16] 0.0, 128
        %719 = vxpose.xlu0.b32.cont [4/16] 0.0, 128
        %720 = vxpose.xlu0.b32.cont [5/16] 0.0, 128
        %721 = vxpose.xlu0.b32.cont [6/16] 0.0, 128
        %722 = vxpose.xlu0.b32.cont [7/16] 0.0, 128
        %723 = vxpose.xlu0.b32.cont [8/16] 0.0, 128
        %724 = vxpose.xlu0.b32.cont [9/16] 0.0, 128
        %725 = vxpose.xlu0.b32.cont [10/16] 0.0, 128
        %726 = vxpose.xlu0.b32.cont [11/16] 0.0, 128
        %727 = vxpose.xlu0.b32.cont [12/16] 0.0, 128
        %728 = vxpose.xlu0.b32.cont [13/16] 0.0, 128
        %729 = vxpose.xlu0.b32.cont [14/16] 0.0, 128
        %730 = vxpose.xlu0.b32.cont [15/16] 0.0, 128
        %731 = vxpose.xlu0.b32.end [16/16] 0.0, 128
        %v732 = vpop.trf.xlu0
        %v733 = vpop.trf.xlu0
        %v734 = vpop.trf.xlu0
        %v735 = vpop.trf.xlu0
        %v736 = vpop.trf.xlu0
        %v737 = vpop.trf.xlu0
        %v738 = vpop.trf.xlu0
        %v739 = vpop.trf.xlu0
        %v740 = vpop.trf.xlu0
        %v741 = vpop.trf.xlu0
        %v742 = vpop.trf.xlu0
        %v743 = vpop.trf.xlu0
        %v744 = vpop.trf.xlu0
        %v745 = vpop.trf.xlu0
        %v746 = vpop.trf.xlu0
        %v747 = vpop.trf.xlu0
        %748 = vxpose.xlu0.b32.start [1/16] %v715, 128
        %749 = vxpose.xlu0.b32.cont [2/16] 0.0, 128
        %750 = vxpose.xlu0.b32.cont [3/16] 0.0, 128
        %751 = vxpose.xlu0.b32.cont [4/16] 0.0, 128
        %752 = vxpose.xlu0.b32.cont [5/16] 0.0, 128
        %753 = vxpose.xlu0.b32.cont [6/16] 0.0, 128
        %754 = vxpose.xlu0.b32.cont [7/16] 0.0, 128
        %755 = vxpose.xlu0.b32.cont [8/16] 0.0, 128
        %756 = vxpose.xlu0.b32.cont [9/16] 0.0, 128
        %757 = vxpose.xlu0.b32.cont [10/16] 0.0, 128
        %758 = vxpose.xlu0.b32.cont [11/16] 0.0, 128
        %759 = vxpose.xlu0.b32.cont [12/16] 0.0, 128
        %760 = vxpose.xlu0.b32.cont [13/16] 0.0, 128
        %761 = vxpose.xlu0.b32.cont [14/16] 0.0, 128
        %762 = vxpose.xlu0.b32.cont [15/16] 0.0, 128
        %763 = vxpose.xlu0.b32.end [16/16] 0.0, 128
        %v764 = vpop.trf.xlu0
        %v765 = vpop.trf.xlu0
        %v766 = vpop.trf.xlu0
        %v767 = vpop.trf.xlu0
        %v768 = vpop.trf.xlu0
        %v769 = vpop.trf.xlu0
        %v770 = vpop.trf.xlu0
        %v771 = vpop.trf.xlu0
        %v772 = vpop.trf.xlu0
        %v773 = vpop.trf.xlu0
        %v774 = vpop.trf.xlu0
        %v775 = vpop.trf.xlu0
        %v776 = vpop.trf.xlu0
        %v777 = vpop.trf.xlu0
        %v778 = vpop.trf.xlu0
        %v779 = vpop.trf.xlu0
        %780 = vst.msk [vmem:[%s221] sm:$0xff] %vm681, %v732
        %781 = vst.msk [vmem:[%s221 + $0x8] sm:$0xff] %vm681, %v733
        %782 = vst.msk [vmem:[%s221 + $0x10] sm:$0xff] %vm681, %v734
        %783 = vst.msk [vmem:[%s221 + $0x18] sm:$0xff] %vm681, %v735
        %784 = vst.msk [vmem:[%s221 + $0x20] sm:$0xff] %vm681, %v736
        %785 = vst.msk [vmem:[%s221 + $0x28] sm:$0xff] %vm681, %v737
        %786 = vst.msk [vmem:[%s221 + $0x30] sm:$0xff] %vm681, %v738
        %787 = vst.msk [vmem:[%s221 + $0x38] sm:$0xff] %vm681, %v739
        %788 = vst.msk [vmem:[%s221 + $0x40] sm:$0xff] %vm681, %v740
        %789 = vst.msk [vmem:[%s221 + $0x48] sm:$0xff] %vm681, %v741
        %790 = vst.msk [vmem:[%s221 + $0x50] sm:$0xff] %vm681, %v742
        %791 = vst.msk [vmem:[%s221 + $0x58] sm:$0xff] %vm681, %v743
        %792 = vst.msk [vmem:[%s221 + $0x60] sm:$0xff] %vm681, %v744
        %793 = vst.msk [vmem:[%s221 + $0x68] sm:$0xff] %vm681, %v745
        %794 = vst.msk [vmem:[%s221 + $0x70] sm:$0xff] %vm681, %v746
        %795 = vst.msk [vmem:[%s221 + $0x78] sm:$0xff] %vm681, %v747
        %796 = vst.msk [vmem:[%s221 + $0x80] sm:$0xff] %vm681, %v764
        %797 = vst.msk [vmem:[%s221 + $0x88] sm:$0xff] %vm681, %v765
        %798 = vst.msk [vmem:[%s221 + $0x90] sm:$0xff] %vm681, %v766
        %799 = vst.msk [vmem:[%s221 + $0x98] sm:$0xff] %vm681, %v767
        %800 = vst.msk [vmem:[%s221 + $0xa0] sm:$0xff] %vm681, %v768
        %801 = vst.msk [vmem:[%s221 + $0xa8] sm:$0xff] %vm681, %v769
        %802 = vst.msk [vmem:[%s221 + $0xb0] sm:$0xff] %vm681, %v770
        %803 = vst.msk [vmem:[%s221 + $0xb8] sm:$0xff] %vm681, %v771
        %804 = vst.msk [vmem:[%s221 + $0xc0] sm:$0xff] %vm681, %v772
        %805 = vst.msk [vmem:[%s221 + $0xc8] sm:$0xff] %vm681, %v773
        %806 = vst.msk [vmem:[%s221 + $0xd0] sm:$0xff] %vm681, %v774
        %807 = vst.msk [vmem:[%s221 + $0xd8] sm:$0xff] %vm681, %v775
        %808 = vst.msk [vmem:[%s221 + $0xe0] sm:$0xff] %vm681, %v776
        %809 = vst.msk [vmem:[%s221 + $0xe8] sm:$0xff] %vm681, %v777
        %810 = vst.msk [vmem:[%s221 + $0xf0] sm:$0xff] %vm681, %v778
        %811 = vst.msk [vmem:[%s221 + $0xf8] sm:$0xff] %vm681, %v779
        %v812 = vld [vmem:[%s528] sm:$0xff]
        %v813 = vld [vmem:[%s528 + $0x8] sm:$0xff]
        %814 = vxpose.xlu0.b32.start [1/16] %v812, 128
        %815 = vxpose.xlu0.b32.cont [2/16] 0.0, 128
        %816 = vxpose.xlu0.b32.cont [3/16] 0.0, 128
        %817 = vxpose.xlu0.b32.cont [4/16] 0.0, 128
        %818 = vxpose.xlu0.b32.cont [5/16] 0.0, 128
        %819 = vxpose.xlu0.b32.cont [6/16] 0.0, 128
        %820 = vxpose.xlu0.b32.cont [7/16] 0.0, 128
        %821 = vxpose.xlu0.b32.cont [8/16] 0.0, 128
        %822 = vxpose.xlu0.b32.cont [9/16] 0.0, 128
        %823 = vxpose.xlu0.b32.cont [10/16] 0.0, 128
        %824 = vxpose.xlu0.b32.cont [11/16] 0.0, 128
        %825 = vxpose.xlu0.b32.cont [12/16] 0.0, 128
        %826 = vxpose.xlu0.b32.cont [13/16] 0.0, 128
        %827 = vxpose.xlu0.b32.cont [14/16] 0.0, 128
        %828 = vxpose.xlu0.b32.cont [15/16] 0.0, 128
        %829 = vxpose.xlu0.b32.end [16/16] 0.0, 128
        %v830 = vpop.trf.xlu0
        %v831 = vpop.trf.xlu0
        %v832 = vpop.trf.xlu0
        %v833 = vpop.trf.xlu0
        %v834 = vpop.trf.xlu0
        %v835 = vpop.trf.xlu0
        %v836 = vpop.trf.xlu0
        %v837 = vpop.trf.xlu0
        %v838 = vpop.trf.xlu0
        %v839 = vpop.trf.xlu0
        %v840 = vpop.trf.xlu0
        %v841 = vpop.trf.xlu0
        %v842 = vpop.trf.xlu0
        %v843 = vpop.trf.xlu0
        %v844 = vpop.trf.xlu0
        %v845 = vpop.trf.xlu0
        %846 = vxpose.xlu0.b32.start [1/16] %v813, 128
        %847 = vxpose.xlu0.b32.cont [2/16] 0.0, 128
        %848 = vxpose.xlu0.b32.cont [3/16] 0.0, 128
        %849 = vxpose.xlu0.b32.cont [4/16] 0.0, 128
        %850 = vxpose.xlu0.b32.cont [5/16] 0.0, 128
        %851 = vxpose.xlu0.b32.cont [6/16] 0.0, 128
        %852 = vxpose.xlu0.b32.cont [7/16] 0.0, 128
        %853 = vxpose.xlu0.b32.cont [8/16] 0.0, 128
        %854 = vxpose.xlu0.b32.cont [9/16] 0.0, 128
        %855 = vxpose.xlu0.b32.cont [10/16] 0.0, 128
        %856 = vxpose.xlu0.b32.cont [11/16] 0.0, 128
        %857 = vxpose.xlu0.b32.cont [12/16] 0.0, 128
        %858 = vxpose.xlu0.b32.cont [13/16] 0.0, 128
        %859 = vxpose.xlu0.b32.cont [14/16] 0.0, 128
        %860 = vxpose.xlu0.b32.cont [15/16] 0.0, 128
        %861 = vxpose.xlu0.b32.end [16/16] 0.0, 128
        %v862 = vpop.trf.xlu0
        %v863 = vpop.trf.xlu0
        %v864 = vpop.trf.xlu0
        %v865 = vpop.trf.xlu0
        %v866 = vpop.trf.xlu0
        %v867 = vpop.trf.xlu0
        %v868 = vpop.trf.xlu0
        %v869 = vpop.trf.xlu0
        %v870 = vpop.trf.xlu0
        %v871 = vpop.trf.xlu0
        %v872 = vpop.trf.xlu0
        %v873 = vpop.trf.xlu0
        %v874 = vpop.trf.xlu0
        %v875 = vpop.trf.xlu0
        %v876 = vpop.trf.xlu0
        %v877 = vpop.trf.xlu0
        %s878 = scalar_lea.vmem %s209, 256
        %879 = vst.msk [vmem:[%s878] sm:$0xff] %vm681, %v830
        %880 = vst.msk [vmem:[%s878 + $0x8] sm:$0xff] %vm681, %v831
        %881 = vst.msk [vmem:[%s878 + $0x10] sm:$0xff] %vm681, %v832
        %882 = vst.msk [vmem:[%s878 + $0x18] sm:$0xff] %vm681, %v833
        %883 = vst.msk [vmem:[%s878 + $0x20] sm:$0xff] %vm681, %v834
        %884 = vst.msk [vmem:[%s878 + $0x28] sm:$0xff] %vm681, %v835
        %885 = vst.msk [vmem:[%s878 + $0x30] sm:$0xff] %vm681, %v836
        %886 = vst.msk [vmem:[%s878 + $0x38] sm:$0xff] %vm681, %v837
        %887 = vst.msk [vmem:[%s878 + $0x40] sm:$0xff] %vm681, %v838
        %888 = vst.msk [vmem:[%s878 + $0x48] sm:$0xff] %vm681, %v839
        %889 = vst.msk [vmem:[%s878 + $0x50] sm:$0xff] %vm681, %v840
        %890 = vst.msk [vmem:[%s878 + $0x58] sm:$0xff] %vm681, %v841
        %891 = vst.msk [vmem:[%s878 + $0x60] sm:$0xff] %vm681, %v842
        %892 = vst.msk [vmem:[%s878 + $0x68] sm:$0xff] %vm681, %v843
        %893 = vst.msk [vmem:[%s878 + $0x70] sm:$0xff] %vm681, %v844
        %894 = vst.msk [vmem:[%s878 + $0x78] sm:$0xff] %vm681, %v845
        %895 = vst.msk [vmem:[%s878 + $0x80] sm:$0xff] %vm681, %v862
        %896 = vst.msk [vmem:[%s878 + $0x88] sm:$0xff] %vm681, %v863
        %897 = vst.msk [vmem:[%s878 + $0x90] sm:$0xff] %vm681, %v864
        %898 = vst.msk [vmem:[%s878 + $0x98] sm:$0xff] %vm681, %v865
        %899 = vst.msk [vmem:[%s878 + $0xa0] sm:$0xff] %vm681, %v866
        %900 = vst.msk [vmem:[%s878 + $0xa8] sm:$0xff] %vm681, %v867
        %901 = vst.msk [vmem:[%s878 + $0xb0] sm:$0xff] %vm681, %v868
        %902 = vst.msk [vmem:[%s878 + $0xb8] sm:$0xff] %vm681, %v869
        %903 = vst.msk [vmem:[%s878 + $0xc0] sm:$0xff] %vm681, %v870
        %904 = vst.msk [vmem:[%s878 + $0xc8] sm:$0xff] %vm681, %v871
        %905 = vst.msk [vmem:[%s878 + $0xd0] sm:$0xff] %vm681, %v872
        %906 = vst.msk [vmem:[%s878 + $0xd8] sm:$0xff] %vm681, %v873
        %907 = vst.msk [vmem:[%s878 + $0xe0] sm:$0xff] %vm681, %v874
        %908 = vst.msk [vmem:[%s878 + $0xe8] sm:$0xff] %vm681, %v875
        %909 = vst.msk [vmem:[%s878 + $0xf0] sm:$0xff] %vm681, %v876
        %910 = vst.msk [vmem:[%s878 + $0xf8] sm:$0xff] %vm681, %v877
        %s911 = scalar_lea.vmem %s162, 16 [#allocation3]
        %v912 = vld [vmem:[%s911] sm:$0xff]
        %v913 = vld [vmem:[%s911 + $0x8] sm:$0xff]
        %914 = vxpose.xlu0.b32.start [1/16] %v912, 128
        %915 = vxpose.xlu0.b32.cont [2/16] 0.0, 128
        %916 = vxpose.xlu0.b32.cont [3/16] 0.0, 128
        %917 = vxpose.xlu0.b32.cont [4/16] 0.0, 128
        %918 = vxpose.xlu0.b32.cont [5/16] 0.0, 128
        %919 = vxpose.xlu0.b32.cont [6/16] 0.0, 128
        %920 = vxpose.xlu0.b32.cont [7/16] 0.0, 128
        %921 = vxpose.xlu0.b32.cont [8/16] 0.0, 128
        %922 = vxpose.xlu0.b32.cont [9/16] 0.0, 128
        %923 = vxpose.xlu0.b32.cont [10/16] 0.0, 128
        %924 = vxpose.xlu0.b32.cont [11/16] 0.0, 128
        %925 = vxpose.xlu0.b32.cont [12/16] 0.0, 128
        %926 = vxpose.xlu0.b32.cont [13/16] 0.0, 128
        %927 = vxpose.xlu0.b32.cont [14/16] 0.0, 128
        %928 = vxpose.xlu0.b32.cont [15/16] 0.0, 128
        %929 = vxpose.xlu0.b32.end [16/16] 0.0, 128
        %v930 = vpop.trf.xlu0
        %v931 = vpop.trf.xlu0
        %v932 = vpop.trf.xlu0
        %v933 = vpop.trf.xlu0
        %v934 = vpop.trf.xlu0
        %v935 = vpop.trf.xlu0
        %v936 = vpop.trf.xlu0
        %v937 = vpop.trf.xlu0
        %v938 = vpop.trf.xlu0
        %v939 = vpop.trf.xlu0
        %v940 = vpop.trf.xlu0
        %v941 = vpop.trf.xlu0
        %v942 = vpop.trf.xlu0
        %v943 = vpop.trf.xlu0
        %v944 = vpop.trf.xlu0
        %v945 = vpop.trf.xlu0
        %946 = vxpose.xlu0.b32.start [1/16] %v913, 128
        %947 = vxpose.xlu0.b32.cont [2/16] 0.0, 128
        %948 = vxpose.xlu0.b32.cont [3/16] 0.0, 128
        %949 = vxpose.xlu0.b32.cont [4/16] 0.0, 128
        %950 = vxpose.xlu0.b32.cont [5/16] 0.0, 128
        %951 = vxpose.xlu0.b32.cont [6/16] 0.0, 128
        %952 = vxpose.xlu0.b32.cont [7/16] 0.0, 128
        %953 = vxpose.xlu0.b32.cont [8/16] 0.0, 128
        %954 = vxpose.xlu0.b32.cont [9/16] 0.0, 128
        %955 = vxpose.xlu0.b32.cont [10/16] 0.0, 128
        %956 = vxpose.xlu0.b32.cont [11/16] 0.0, 128
        %957 = vxpose.xlu0.b32.cont [12/16] 0.0, 128
        %958 = vxpose.xlu0.b32.cont [13/16] 0.0, 128
        %959 = vxpose.xlu0.b32.cont [14/16] 0.0, 128
        %960 = vxpose.xlu0.b32.cont [15/16] 0.0, 128
        %961 = vxpose.xlu0.b32.end [16/16] 0.0, 128
        %v962 = vpop.trf.xlu0
        %v963 = vpop.trf.xlu0
        %v964 = vpop.trf.xlu0
        %v965 = vpop.trf.xlu0
        %v966 = vpop.trf.xlu0
        %v967 = vpop.trf.xlu0
        %v968 = vpop.trf.xlu0
        %v969 = vpop.trf.xlu0
        %v970 = vpop.trf.xlu0
        %v971 = vpop.trf.xlu0
        %v972 = vpop.trf.xlu0
        %v973 = vpop.trf.xlu0
        %v974 = vpop.trf.xlu0
        %v975 = vpop.trf.xlu0
        %v976 = vpop.trf.xlu0
        %v977 = vpop.trf.xlu0
        %s978 = scalar_lea.vmem %s221, 256
        %979 = vst.msk [vmem:[%s978] sm:$0xff] %vm681, %v930
        %980 = vst.msk [vmem:[%s978 + $0x8] sm:$0xff] %vm681, %v931
        %981 = vst.msk [vmem:[%s978 + $0x10] sm:$0xff] %vm681, %v932
        %982 = vst.msk [vmem:[%s978 + $0x18] sm:$0xff] %vm681, %v933
        %983 = vst.msk [vmem:[%s978 + $0x20] sm:$0xff] %vm681, %v934
        %984 = vst.msk [vmem:[%s978 + $0x28] sm:$0xff] %vm681, %v935
        %985 = vst.msk [vmem:[%s978 + $0x30] sm:$0xff] %vm681, %v936
        %986 = vst.msk [vmem:[%s978 + $0x38] sm:$0xff] %vm681, %v937
        %987 = vst.msk [vmem:[%s978 + $0x40] sm:$0xff] %vm681, %v938
        %988 = vst.msk [vmem:[%s978 + $0x48] sm:$0xff] %vm681, %v939
        %989 = vst.msk [vmem:[%s978 + $0x50] sm:$0xff] %vm681, %v940
        %990 = vst.msk [vmem:[%s978 + $0x58] sm:$0xff] %vm681, %v941
        %991 = vst.msk [vmem:[%s978 + $0x60] sm:$0xff] %vm681, %v942
        %992 = vst.msk [vmem:[%s978 + $0x68] sm:$0xff] %vm681, %v943
        %993 = vst.msk [vmem:[%s978 + $0x70] sm:$0xff] %vm681, %v944
        %994 = vst.msk [vmem:[%s978 + $0x78] sm:$0xff] %vm681, %v945
        %995 = vst.msk [vmem:[%s978 + $0x80] sm:$0xff] %vm681, %v962
        %996 = vst.msk [vmem:[%s978 + $0x88] sm:$0xff] %vm681, %v963
        %997 = vst.msk [vmem:[%s978 + $0x90] sm:$0xff] %vm681, %v964
        %998 = vst.msk [vmem:[%s978 + $0x98] sm:$0xff] %vm681, %v965
        %999 = vst.msk [vmem:[%s978 + $0xa0] sm:$0xff] %vm681, %v966
        %1000 = vst.msk [vmem:[%s978 + $0xa8] sm:$0xff] %vm681, %v967
        %1001 = vst.msk [vmem:[%s978 + $0xb0] sm:$0xff] %vm681, %v968
        %1002 = vst.msk [vmem:[%s978 + $0xb8] sm:$0xff] %vm681, %v969
        %1003 = vst.msk [vmem:[%s978 + $0xc0] sm:$0xff] %vm681, %v970
        %1004 = vst.msk [vmem:[%s978 + $0xc8] sm:$0xff] %vm681, %v971
        %1005 = vst.msk [vmem:[%s978 + $0xd0] sm:$0xff] %vm681, %v972
        %1006 = vst.msk [vmem:[%s978 + $0xd8] sm:$0xff] %vm681, %v973
        %1007 = vst.msk [vmem:[%s978 + $0xe0] sm:$0xff] %vm681, %v974
        %1008 = vst.msk [vmem:[%s978 + $0xe8] sm:$0xff] %vm681, %v975
        %1009 = vst.msk [vmem:[%s978 + $0xf0] sm:$0xff] %vm681, %v976
        %1010 = vst.msk [vmem:[%s978 + $0xf8] sm:$0xff] %vm681, %v977
        %v1011 = vld [vmem:[%s580] sm:$0xff]
        %v1012 = vld [vmem:[%s580 + $0x8] sm:$0xff]
        %1013 = vxpose.xlu0.b32.start [1/16] %v1011, 128
        %1014 = vxpose.xlu0.b32.cont [2/16] 0.0, 128
        %1015 = vxpose.xlu0.b32.cont [3/16] 0.0, 128
        %1016 = vxpose.xlu0.b32.cont [4/16] 0.0, 128
        %1017 = vxpose.xlu0.b32.cont [5/16] 0.0, 128
        %1018 = vxpose.xlu0.b32.cont [6/16] 0.0, 128
        %1019 = vxpose.xlu0.b32.cont [7/16] 0.0, 128
        %1020 = vxpose.xlu0.b32.cont [8/16] 0.0, 128
        %1021 = vxpose.xlu0.b32.cont [9/16] 0.0, 128
        %1022 = vxpose.xlu0.b32.cont [10/16] 0.0, 128
        %1023 = vxpose.xlu0.b32.cont [11/16] 0.0, 128
        %1024 = vxpose.xlu0.b32.cont [12/16] 0.0, 128
        %1025 = vxpose.xlu0.b32.cont [13/16] 0.0, 128
        %1026 = vxpose.xlu0.b32.cont [14/16] 0.0, 128
        %1027 = vxpose.xlu0.b32.cont [15/16] 0.0, 128
        %1028 = vxpose.xlu0.b32.end [16/16] 0.0, 128
        %v1029 = vpop.trf.xlu0
        %v1030 = vpop.trf.xlu0
        %v1031 = vpop.trf.xlu0
        %v1032 = vpop.trf.xlu0
        %v1033 = vpop.trf.xlu0
        %v1034 = vpop.trf.xlu0
        %v1035 = vpop.trf.xlu0
        %v1036 = vpop.trf.xlu0
        %v1037 = vpop.trf.xlu0
        %v1038 = vpop.trf.xlu0
        %v1039 = vpop.trf.xlu0
        %v1040 = vpop.trf.xlu0
        %v1041 = vpop.trf.xlu0
        %v1042 = vpop.trf.xlu0
        %v1043 = vpop.trf.xlu0
        %v1044 = vpop.trf.xlu0
        %1045 = vxpose.xlu0.b32.start [1/16] %v1012, 128
        %1046 = vxpose.xlu0.b32.cont [2/16] 0.0, 128
        %1047 = vxpose.xlu0.b32.cont [3/16] 0.0, 128
        %1048 = vxpose.xlu0.b32.cont [4/16] 0.0, 128
        %1049 = vxpose.xlu0.b32.cont [5/16] 0.0, 128
        %1050 = vxpose.xlu0.b32.cont [6/16] 0.0, 128
        %1051 = vxpose.xlu0.b32.cont [7/16] 0.0, 128
        %1052 = vxpose.xlu0.b32.cont [8/16] 0.0, 128
        %1053 = vxpose.xlu0.b32.cont [9/16] 0.0, 128
        %1054 = vxpose.xlu0.b32.cont [10/16] 0.0, 128
        %1055 = vxpose.xlu0.b32.cont [11/16] 0.0, 128
        %1056 = vxpose.xlu0.b32.cont [12/16] 0.0, 128
        %1057 = vxpose.xlu0.b32.cont [13/16] 0.0, 128
        %1058 = vxpose.xlu0.b32.cont [14/16] 0.0, 128
        %1059 = vxpose.xlu0.b32.cont [15/16] 0.0, 128
        %1060 = vxpose.xlu0.b32.end [16/16] 0.0, 128
        %v1061 = vpop.trf.xlu0
        %v1062 = vpop.trf.xlu0
        %v1063 = vpop.trf.xlu0
        %v1064 = vpop.trf.xlu0
        %v1065 = vpop.trf.xlu0
        %v1066 = vpop.trf.xlu0
        %v1067 = vpop.trf.xlu0
        %v1068 = vpop.trf.xlu0
        %v1069 = vpop.trf.xlu0
        %v1070 = vpop.trf.xlu0
        %v1071 = vpop.trf.xlu0
        %v1072 = vpop.trf.xlu0
        %v1073 = vpop.trf.xlu0
        %v1074 = vpop.trf.xlu0
        %v1075 = vpop.trf.xlu0
        %v1076 = vpop.trf.xlu0
        %s1077 = scalar_lea.vmem %s209, 512
        %1078 = vst.msk [vmem:[%s1077] sm:$0xff] %vm681, %v1029
        %1079 = vst.msk [vmem:[%s1077 + $0x8] sm:$0xff] %vm681, %v1030
        %1080 = vst.msk [vmem:[%s1077 + $0x10] sm:$0xff] %vm681, %v1031
        %1081 = vst.msk [vmem:[%s1077 + $0x18] sm:$0xff] %vm681, %v1032
        %1082 = vst.msk [vmem:[%s1077 + $0x20] sm:$0xff] %vm681, %v1033
        %1083 = vst.msk [vmem:[%s1077 + $0x28] sm:$0xff] %vm681, %v1034
        %1084 = vst.msk [vmem:[%s1077 + $0x30] sm:$0xff] %vm681, %v1035
        %1085 = vst.msk [vmem:[%s1077 + $0x38] sm:$0xff] %vm681, %v1036
        %1086 = vst.msk [vmem:[%s1077 + $0x40] sm:$0xff] %vm681, %v1037
        %1087 = vst.msk [vmem:[%s1077 + $0x48] sm:$0xff] %vm681, %v1038
        %1088 = vst.msk [vmem:[%s1077 + $0x50] sm:$0xff] %vm681, %v1039
        %1089 = vst.msk [vmem:[%s1077 + $0x58] sm:$0xff] %vm681, %v1040
        %1090 = vst.msk [vmem:[%s1077 + $0x60] sm:$0xff] %vm681, %v1041
        %1091 = vst.msk [vmem:[%s1077 + $0x68] sm:$0xff] %vm681, %v1042
        %1092 = vst.msk [vmem:[%s1077 + $0x70] sm:$0xff] %vm681, %v1043
        %1093 = vst.msk [vmem:[%s1077 + $0x78] sm:$0xff] %vm681, %v1044
        %1094 = vst.msk [vmem:[%s1077 + $0x80] sm:$0xff] %vm681, %v1061
        %1095 = vst.msk [vmem:[%s1077 + $0x88] sm:$0xff] %vm681, %v1062
        %1096 = vst.msk [vmem:[%s1077 + $0x90] sm:$0xff] %vm681, %v1063
        %1097 = vst.msk [vmem:[%s1077 + $0x98] sm:$0xff] %vm681, %v1064
        %1098 = vst.msk [vmem:[%s1077 + $0xa0] sm:$0xff] %vm681, %v1065
        %1099 = vst.msk [vmem:[%s1077 + $0xa8] sm:$0xff] %vm681, %v1066
        %1100 = vst.msk [vmem:[%s1077 + $0xb0] sm:$0xff] %vm681, %v1067
        %1101 = vst.msk [vmem:[%s1077 + $0xb8] sm:$0xff] %vm681, %v1068
        %1102 = vst.msk [vmem:[%s1077 + $0xc0] sm:$0xff] %vm681, %v1069
        %1103 = vst.msk [vmem:[%s1077 + $0xc8] sm:$0xff] %vm681, %v1070
        %1104 = vst.msk [vmem:[%s1077 + $0xd0] sm:$0xff] %vm681, %v1071
        %1105 = vst.msk [vmem:[%s1077 + $0xd8] sm:$0xff] %vm681, %v1072
        %1106 = vst.msk [vmem:[%s1077 + $0xe0] sm:$0xff] %vm681, %v1073
        %1107 = vst.msk [vmem:[%s1077 + $0xe8] sm:$0xff] %vm681, %v1074
        %1108 = vst.msk [vmem:[%s1077 + $0xf0] sm:$0xff] %vm681, %v1075
        %1109 = vst.msk [vmem:[%s1077 + $0xf8] sm:$0xff] %vm681, %v1076
        %s1110 = scalar_lea.vmem %s162, 32 [#allocation3]
        %v1111 = vld [vmem:[%s1110] sm:$0xff]
        %v1112 = vld [vmem:[%s1110 + $0x8] sm:$0xff]
        %1113 = vxpose.xlu0.b32.start [1/16] %v1111, 128
        %1114 = vxpose.xlu0.b32.cont [2/16] 0.0, 128
        %1115 = vxpose.xlu0.b32.cont [3/16] 0.0, 128
        %1116 = vxpose.xlu0.b32.cont [4/16] 0.0, 128
        %1117 = vxpose.xlu0.b32.cont [5/16] 0.0, 128
        %1118 = vxpose.xlu0.b32.cont [6/16] 0.0, 128
        %1119 = vxpose.xlu0.b32.cont [7/16] 0.0, 128
        %1120 = vxpose.xlu0.b32.cont [8/16] 0.0, 128
        %1121 = vxpose.xlu0.b32.cont [9/16] 0.0, 128
        %1122 = vxpose.xlu0.b32.cont [10/16] 0.0, 128
        %1123 = vxpose.xlu0.b32.cont [11/16] 0.0, 128
        %1124 = vxpose.xlu0.b32.cont [12/16] 0.0, 128
        %1125 = vxpose.xlu0.b32.cont [13/16] 0.0, 128
        %1126 = vxpose.xlu0.b32.cont [14/16] 0.0, 128
        %1127 = vxpose.xlu0.b32.cont [15/16] 0.0, 128
        %1128 = vxpose.xlu0.b32.end [16/16] 0.0, 128
        %v1129 = vpop.trf.xlu0
        %v1130 = vpop.trf.xlu0
        %v1131 = vpop.trf.xlu0
        %v1132 = vpop.trf.xlu0
        %v1133 = vpop.trf.xlu0
        %v1134 = vpop.trf.xlu0
        %v1135 = vpop.trf.xlu0
        %v1136 = vpop.trf.xlu0
        %v1137 = vpop.trf.xlu0
        %v1138 = vpop.trf.xlu0
        %v1139 = vpop.trf.xlu0
        %v1140 = vpop.trf.xlu0
        %v1141 = vpop.trf.xlu0
        %v1142 = vpop.trf.xlu0
        %v1143 = vpop.trf.xlu0
        %v1144 = vpop.trf.xlu0
        %1145 = vxpose.xlu0.b32.start [1/16] %v1112, 128
        %1146 = vxpose.xlu0.b32.cont [2/16] 0.0, 128
        %1147 = vxpose.xlu0.b32.cont [3/16] 0.0, 128
        %1148 = vxpose.xlu0.b32.cont [4/16] 0.0, 128
        %1149 = vxpose.xlu0.b32.cont [5/16] 0.0, 128
        %1150 = vxpose.xlu0.b32.cont [6/16] 0.0, 128
        %1151 = vxpose.xlu0.b32.cont [7/16] 0.0, 128
        %1152 = vxpose.xlu0.b32.cont [8/16] 0.0, 128
        %1153 = vxpose.xlu0.b32.cont [9/16] 0.0, 128
        %1154 = vxpose.xlu0.b32.cont [10/16] 0.0, 128
        %1155 = vxpose.xlu0.b32.cont [11/16] 0.0, 128
        %1156 = vxpose.xlu0.b32.cont [12/16] 0.0, 128
        %1157 = vxpose.xlu0.b32.cont [13/16] 0.0, 128
        %1158 = vxpose.xlu0.b32.cont [14/16] 0.0, 128
        %1159 = vxpose.xlu0.b32.cont [15/16] 0.0, 128
        %1160 = vxpose.xlu0.b32.end [16/16] 0.0, 128
        %v1161 = vpop.trf.xlu0
        %v1162 = vpop.trf.xlu0
        %v1163 = vpop.trf.xlu0
        %v1164 = vpop.trf.xlu0
        %v1165 = vpop.trf.xlu0
        %v1166 = vpop.trf.xlu0
        %v1167 = vpop.trf.xlu0
        %v1168 = vpop.trf.xlu0
        %v1169 = vpop.trf.xlu0
        %v1170 = vpop.trf.xlu0
        %v1171 = vpop.trf.xlu0
        %v1172 = vpop.trf.xlu0
        %v1173 = vpop.trf.xlu0
        %v1174 = vpop.trf.xlu0
        %v1175 = vpop.trf.xlu0
        %v1176 = vpop.trf.xlu0
        %s1177 = scalar_lea.vmem %s221, 512
        %1178 = vst.msk [vmem:[%s1177] sm:$0xff] %vm681, %v1129
        %1179 = vst.msk [vmem:[%s1177 + $0x8] sm:$0xff] %vm681, %v1130
        %1180 = vst.msk [vmem:[%s1177 + $0x10] sm:$0xff] %vm681, %v1131
        %1181 = vst.msk [vmem:[%s1177 + $0x18] sm:$0xff] %vm681, %v1132
        %1182 = vst.msk [vmem:[%s1177 + $0x20] sm:$0xff] %vm681, %v1133
        %1183 = vst.msk [vmem:[%s1177 + $0x28] sm:$0xff] %vm681, %v1134
        %1184 = vst.msk [vmem:[%s1177 + $0x30] sm:$0xff] %vm681, %v1135
        %1185 = vst.msk [vmem:[%s1177 + $0x38] sm:$0xff] %vm681, %v1136
        %1186 = vst.msk [vmem:[%s1177 + $0x40] sm:$0xff] %vm681, %v1137
        %1187 = vst.msk [vmem:[%s1177 + $0x48] sm:$0xff] %vm681, %v1138
        %1188 = vst.msk [vmem:[%s1177 + $0x50] sm:$0xff] %vm681, %v1139
        %1189 = vst.msk [vmem:[%s1177 + $0x58] sm:$0xff] %vm681, %v1140
        %1190 = vst.msk [vmem:[%s1177 + $0x60] sm:$0xff] %vm681, %v1141
        %1191 = vst.msk [vmem:[%s1177 + $0x68] sm:$0xff] %vm681, %v1142
        %1192 = vst.msk [vmem:[%s1177 + $0x70] sm:$0xff] %vm681, %v1143
        %1193 = vst.msk [vmem:[%s1177 + $0x78] sm:$0xff] %vm681, %v1144
        %1194 = vst.msk [vmem:[%s1177 + $0x80] sm:$0xff] %vm681, %v1161
        %1195 = vst.msk [vmem:[%s1177 + $0x88] sm:$0xff] %vm681, %v1162
        %1196 = vst.msk [vmem:[%s1177 + $0x90] sm:$0xff] %vm681, %v1163
        %1197 = vst.msk [vmem:[%s1177 + $0x98] sm:$0xff] %vm681, %v1164
        %1198 = vst.msk [vmem:[%s1177 + $0xa0] sm:$0xff] %vm681, %v1165
        %1199 = vst.msk [vmem:[%s1177 + $0xa8] sm:$0xff] %vm681, %v1166
        %1200 = vst.msk [vmem:[%s1177 + $0xb0] sm:$0xff] %vm681, %v1167
        %1201 = vst.msk [vmem:[%s1177 + $0xb8] sm:$0xff] %vm681, %v1168
        %1202 = vst.msk [vmem:[%s1177 + $0xc0] sm:$0xff] %vm681, %v1169
        %1203 = vst.msk [vmem:[%s1177 + $0xc8] sm:$0xff] %vm681, %v1170
        %1204 = vst.msk [vmem:[%s1177 + $0xd0] sm:$0xff] %vm681, %v1171
        %1205 = vst.msk [vmem:[%s1177 + $0xd8] sm:$0xff] %vm681, %v1172
        %1206 = vst.msk [vmem:[%s1177 + $0xe0] sm:$0xff] %vm681, %v1173
        %1207 = vst.msk [vmem:[%s1177 + $0xe8] sm:$0xff] %vm681, %v1174
        %1208 = vst.msk [vmem:[%s1177 + $0xf0] sm:$0xff] %vm681, %v1175
        %1209 = vst.msk [vmem:[%s1177 + $0xf8] sm:$0xff] %vm681, %v1176
        %s1210 = smul.u32 3, %s21
        %s1211 = smul.u32 32, %s22
        %p1212 = scmp.lt.s32.totalorder %s1210, 5
        %s1213 = scalar_select %p1212, %s1210, 5
        %p1214 = scmp.lt.s32.totalorder %s1211, 31
        %s1215 = scalar_select %p1214, %s1211, 31
        %s1216 = smul.addr %s1213, 32
        %s1217 = sadd.s32 %s1215, %s1216
        %s1218 = smul.addr %s1217, 8
        %s1219 = scalar_lea.vmem %s1, %s1218
        %s1220 = smul.u32 3, %s21
        %s1221 = smul.u32 32, %s22
        %p1222 = scmp.lt.s32.totalorder %s1220, 5
        %s1223 = scalar_select %p1222, %s1220, 5
        %p1224 = scmp.lt.s32.totalorder %s1221, 31
        %s1225 = scalar_select %p1224, %s1221, 31
        %s1226 = smul.addr %s1223, 32
        %s1227 = sadd.s32 %s1225, %s1226
        %s1228 = smul.addr %s1227, 8
        %s1229 = scalar_lea.vmem %s2, %s1228
        // Predicated region
        $region29: #{tpu_custom_call.1} parent=23 // pred_check
          %p1230 = pneg %p77
        $region30: #{tpu_custom_call.1} parent=23 // pred_check_branch
          %1232 = sbr.rel (%p1230) target = $region32
        $region31: #{tpu_custom_call.1} parent=23 // pred_region
          %s1233 = smul.u32 3, %s21
          %s1234 = smul.u32 32, %s22
        $region32: #{tpu_custom_call.1} parent=23 // pred_fallthru
          _
        // Predicated region
        $region33: #{tpu_custom_call.1} parent=23 // pred_check
          %p1235 = pneg %p105
        $region34: #{tpu_custom_call.1} parent=23 // pred_check_branch
          %1237 = sbr.rel (%p1235) target = $region36
        $region35: #{tpu_custom_call.1} parent=23 // pred_region
          %s1238 = smul.u32 3, %s21
          %s1239 = smul.u32 32, %s22
        $region36: #{tpu_custom_call.1} parent=23 // pred_fallthru
          _
      $region24: #{tpu_custom_call.1} parent=5 // pred_fallthru
        _
      %p1240 = scmp.le.s32.totalorder 2, %s12
      // Predicated region
      $region37: #{tpu_custom_call.1} parent=5 // pred_check
        %p1241 = pneg %p1240
      $region38: #{tpu_custom_call.1} parent=5 // pred_check_branch
        %1243 = sbr.rel (%p1241) target = $region40
      $region39: #{tpu_custom_call.1} parent=5 // pred_region
        %s1244 = ssub.s32 %s12, 2
        // Predicated region
        $region41: #{tpu_custom_call.1} parent=39 // pred_check
          %p1245 = pneg %p83
        $region42: #{tpu_custom_call.1} parent=39 // pred_check_branch
          %1247 = sbr.rel (%p1245) target = $region44
        $region43: #{tpu_custom_call.1} parent=39 // pred_region
          %s1248 = smul.u32 3, %s23
          %s1249 = smul.u32 32, %s24
          %p1250 = scmp.lt.s32.totalorder %s1248, 5
          %s1251 = scalar_select %p1250, %s1248, 5
          %p1252 = scmp.lt.s32.totalorder %s1249, 31
          %s1253 = scalar_select %p1252, %s1249, 31
          %s1254 = smul.addr %s1251, 32
          %s1255 = sadd.s32 %s1253, %s1254
          %s1256 = smul.addr %s1255, 8
          %s1257 = scalar_lea.vmem %s1, %s1256
        $region44: #{tpu_custom_call.1} parent=39 // pred_fallthru
          _
        // Predicated region
        $region45: #{tpu_custom_call.1} parent=39 // pred_check
          %p1258 = pneg %p111
        $region46: #{tpu_custom_call.1} parent=39 // pred_check_branch
          %1260 = sbr.rel (%p1258) target = $region48
        $region47: #{tpu_custom_call.1} parent=39 // pred_region
          %s1261 = smul.u32 3, %s23
          %s1262 = smul.u32 32, %s24
          %p1263 = scmp.lt.s32.totalorder %s1261, 5
          %s1264 = scalar_select %p1263, %s1261, 5
          %p1265 = scmp.lt.s32.totalorder %s1262, 31
          %s1266 = scalar_select %p1265, %s1262, 31
          %s1267 = smul.addr %s1264, 32
          %s1268 = sadd.s32 %s1266, %s1267
          %s1269 = smul.addr %s1268, 8
          %s1270 = scalar_lea.vmem %s2, %s1269
        $region48: #{tpu_custom_call.1} parent=39 // pred_fallthru
          _
      $region40: #{tpu_custom_call.1} parent=5 // pred_fallthru
        _
    $region6: #{tpu_custom_call.1} parent=1 // loop_footer
      %s16 = sadd.s32 1, %s12
    $region7: #{tpu_custom_call.1} parent=1 // loop_footer_branch
      %11 = sbr.rel target = $region3
    $region8: #{tpu_custom_call.1} parent=1 // loop_exit
      _
    %1271 = vsyncpa [#allocation4], 1
    %s1272 = scalar_lea.sflag [#allocation4], 1
    %1273 = vsyncpa %s1272, 1

</llo_original>
